<compile_context>
chip_gen: v5e
topology: v5e:2x2
jax: 0.10.0
libtpu: 0.0.40
codegen_flags: <defaults>
</compile_context>

<pallas_src>
import jax
import jax.numpy as jnp
from jax import lax
from jax.experimental import pallas as pl
from jax.experimental.pallas import tpu as pltpu


def _rows_per_strip(H, W):
    """Whole rows per strip; aim for a lane-dense strip of <=1024 lanes,
    preferring strip widths that are multiples of 256 (v6e MXU) or 128."""
    max_tr = min(H, max(1, -(-1024 // W)))
    for align in (256, 128):
        for tr in range(max_tr, 0, -1):
            if (tr * W) % align == 0:
                return tr
    return min(H, max(1, 512 // W)) if W <= 512 else 1


def _make_kernel(H, W, Cp):
    """Fused BasicBlock kernel for one batch element (fixed H, W, padded channels Cp)."""
    HW = H * W
    HALO = W + 1                     # covers every tap shift d in [-(W+1), W+1]
    TR = _rows_per_strip(H, W)
    # (lane offset, lane count) per whole-row strip; static -> unrolled in the trace.
    strips = tuple((r0 * W, min(TR, H - r0) * W) for r0 in range(0, H, TR))

    def conv_strip(load, w_ref, mcol_ref, s0, SW):
        """3x3 SAME conv over one strip of whole rows.

        load(lo, hi) -> (Cp, hi-lo) bf16 slice of the conv input slab.
        Returns the f32 accumulator (Cp, SW) for output lanes [s0, s0+SW).
        """
        # Haloed bf16 window over global lanes [s0-HALO, s0+SW+HALO); lanes that
        # fall outside the image (above row 0 / below row H-1) are zero-filled,
        # which is exactly the SAME-padding row behaviour.
        lo = max(0, s0 - HALO)
        hi = min(HW, s0 + SW + HALO)
        parts = []
        if lo > s0 - HALO:
            parts.append(jnp.zeros((Cp, lo - (s0 - HALO)), jnp.bfloat16))
        parts.append(load(lo, hi))
        if hi < s0 + SW + HALO:
            parts.append(jnp.zeros((Cp, (s0 + SW + HALO) - hi), jnp.bfloat16))
        win = parts[0] if len(parts) == 1 else jnp.concatenate(parts, axis=1)

        acc = None
        for k in range(9):
            dy, dx = k // 3 - 1, k % 3 - 1
            d = dy * W + dx                       # flattened source shift
            # Shift applied to the bf16 input: output lane q sources window lane
            # HALO + q + d  ->  a static lane-slice of the window.
            xk = win[:, HALO + d: HALO + d + SW]
            if dx != 0:
                # Column-wrap mask (select, not multiply): zero outputs whose
                # source column falls outside [0, W).  Row validity is already
                # handled by the zero-padded window.
                m = mcol_ref[0 if dx < 0 else 1, :, s0:s0 + SW]   # (1, SW) f32
                xk = jnp.where(m != 0.0, xk, jnp.zeros((), jnp.bfloat16))
            contrib = jnp.dot(w_ref[k], xk, preferred_element_type=jnp.float32)
            acc = contrib if acc is None else acc + contrib
        return acc

    def kernel(x_ref, mcol_ref, w1_ref, w2_ref, s1_ref, b1_ref, s2_ref, b2_ref,
               o_ref, h_ref):
        # x_ref   : (1, Cp, HW) f32   one batch element, channels x flat-spatial
        # mcol_ref: (2, 1, HW)  f32   column-validity masks for dx = -1 / +1
        # w*_ref  : (9, Cp, Cp) bf16  tap k = ky*3+kx, laid out (Cout, Cin)
        # s*/b*   : (Cp, 1)     f32   folded BatchNorm scale / shift
        # o_ref   : (1, Cp, HW) f32
        # h_ref   : (Cp, HW)    bf16  VMEM scratch holding relu(bn1(conv1(x)))
        load_x = lambda lo, hi: x_ref[0, :, lo:hi].astype(jnp.bfloat16)
        load_h = lambda lo, hi: h_ref[:, lo:hi]

        # conv1 -> folded bn1 -> relu  (store h as bf16 for the second conv)
        for s0, SW in strips:
            acc = conv_strip(load_x, w1_ref, mcol_ref, s0, SW)
            h = jnp.maximum(acc * s1_ref[...] + b1_ref[...], 0.0)
            h_ref[:, s0:s0 + SW] = h.astype(jnp.bfloat16)

        # conv2 -> folded bn2 -> residual add -> relu  (epilogue in f32)
        for s0, SW in strips:
            acc = conv_strip(load_h, w2_ref, mcol_ref, s0, SW)
            y = acc * s2_ref[...] + b2_ref[...] + x_ref[0, :, s0:s0 + SW]
            o_ref[0, :, s0:s0 + SW] = jnp.maximum(y, 0.0).astype(o_ref.dtype)

    return kernel


def basic_block_forward(x_nchw, params):
    """BasicBlock forward (stride=1, no downsample). x: (N, C, H, W) f32."""
    w1, w2, s1, b1, s2, b2 = params           # w*: (3,3,C,C) HWIO, s/b: (C,)
    N, C, H, W = x_nchw.shape
    HW = H * W
    Cp = max(16, ((C + 15) // 16) * 16)       # bf16 sublane granule, NOT 128
    pc = Cp - C

    # NCHW -> (N, C, H*W) is a pure reshape; channel pad only if C % 16 != 0
    # (real ResNet widths 64/128/256/512 need no pad and no final slice).
    xf = x_nchw.reshape(N, C, HW)
    if pc:
        xf = jnp.pad(xf, ((0, 0), (0, pc), (0, 0)))

    def prep_w(w):   # (3,3,Cin,Cout) HWIO -> (9, Cout_p, Cin_p) bf16
        if pc:
            w = jnp.pad(w, ((0, 0), (0, 0), (0, pc), (0, pc)))
        return jnp.transpose(w, (0, 1, 3, 2)).reshape(9, Cp, Cp).astype(jnp.bfloat16)

    def prep_v(v):   # (C,) -> (Cp, 1) f32
        if pc:
            v = jnp.pad(v, (0, pc))
        return v.reshape(Cp, 1).astype(jnp.float32)

    w1t, w2t = prep_w(w1), prep_w(w2)
    s1c, b1c, s2c, b2c = prep_v(s1), prep_v(b1), prep_v(s2), prep_v(b2)

    # Two column-validity masks over flattened spatial positions:
    #   [0]: output col >= 1     (valid source exists for dx = -1)
    #   [1]: output col <= W-2   (valid source exists for dx = +1)
    col = jnp.arange(HW, dtype=jnp.int32) % W
    mcol = jnp.stack([
        (col >= 1).astype(jnp.float32).reshape(1, HW),
        (col <= W - 2).astype(jnp.float32).reshape(1, HW),
    ])                                                     # (2, 1, HW)

    # Constants (weights / BN params / masks) live whole in VMEM: single copy,
    # no pipeline double-buffering.
    vmem = pl.BlockSpec(memory_space=pltpu.MemorySpace.VMEM)

    # Explicit VMEM budget: double-buffered x/out blocks + h scratch + residents,
    # with slack; capped at 48 MiB so it is valid on v7x (64 MiB/TC) too.
    est = (4 * Cp * HW * 4          # 2x double-buffered x + out blocks (f32)
           + Cp * HW * 2            # h scratch (bf16)
           + 2 * 9 * Cp * Cp * 2    # weights (bf16)
           + 2 * HW * 4 + 4 * Cp * 4)
    vmem_limit = min(max(2 * est + (4 << 20), 16 << 20), 48 << 20)

    out = pl.pallas_call(
        _make_kernel(H, W, Cp),
        out_shape=jax.ShapeDtypeStruct((N, Cp, HW), jnp.float32),
        grid=(N,),
        in_specs=[
            pl.BlockSpec((1, Cp, HW), lambda b: (b, 0, 0)),   # x (pipelined)
            vmem,                                             # column masks
            vmem, vmem,                                       # w1, w2
            vmem, vmem, vmem, vmem,                           # s1, b1, s2, b2
        ],
        out_specs=pl.BlockSpec((1, Cp, HW), lambda b: (b, 0, 0)),
        scratch_shapes=[pltpu.VMEM((Cp, HW), jnp.bfloat16)],  # h (conv1 output)
        compiler_params=pltpu.CompilerParams(
            dimension_semantics=("parallel",),
            vmem_limit_bytes=vmem_limit),
    )(xf, mcol, w1t, w2t, s1c, b1c, s2c, b2c)

    if pc:
        out = out[:, :C, :]
    return out.reshape(N, C, H, W)


def _ref_forward_nchw(x_nchw, params):
    """Pure-JAX reference with the same numerics policy as the kernel
    (bf16 matmul operands, f32 accumulation, f32 epilogue, folded BN)."""
    w1, w2, s1, b1, s2, b2 = params
    x = jnp.transpose(x_nchw, (0, 2, 3, 1))               # NHWC
    dn = ("NHWC", "HWIO", "NHWC")
    y = lax.conv_general_dilated(
        x.astype(jnp.bfloat16), w1.astype(jnp.bfloat16), (1, 1), "SAME",
        dimension_numbers=dn, preferred_element_type=jnp.float32)
    y = jnp.maximum(y * s1 + b1, 0.0)
    y = lax.conv_general_dilated(
        y.astype(jnp.bfloat16), w2.astype(jnp.bfloat16), (1, 1), "SAME",
        dimension_numbers=dn, preferred_element_type=jnp.float32)
    y = y * s2 + b2
    y = jnp.maximum(y + x, 0.0)
    return jnp.transpose(y, (0, 3, 1, 2))


def _make_params(key, planes):
    """Deterministic synthetic parameters (conv weights + folded BatchNorm)."""
    ks = jax.random.split(key, 10)
    C = planes
    eps = 1e-5
    w1 = 0.1 * jax.random.normal(ks[0], (3, 3, C, C), jnp.float32)  # HWIO
    w2 = 0.1 * jax.random.normal(ks[1], (3, 3, C, C), jnp.float32)

    gamma1 = 1.0 + 0.1 * jax.random.normal(ks[2], (C,), jnp.float32)
    beta1 = 0.1 * jax.random.normal(ks[3], (C,), jnp.float32)
    mean1 = 0.05 * jax.random.normal(ks[4], (C,), jnp.float32)
    var1 = 1.0 + 0.1 * jax.random.uniform(ks[5], (C,), jnp.float32)

    gamma2 = 1.0 + 0.1 * jax.random.normal(ks[6], (C,), jnp.float32)
    beta2 = 0.1 * jax.random.normal(ks[7], (C,), jnp.float32)
    mean2 = 0.05 * jax.random.normal(ks[8], (C,), jnp.float32)
    var2 = 1.0 + 0.1 * jax.random.uniform(ks[9], (C,), jnp.float32)

    s1 = gamma1 / jnp.sqrt(var1 + eps)
    b1 = beta1 - mean1 * s1
    s2 = gamma2 / jnp.sqrt(var2 + eps)
    b2 = beta2 - mean2 * s2
    return (w1, w2, s1, b1, s2, b2)


if __name__ == "__main__":
    key = jax.random.PRNGKey(0)
    k_x, k_p = jax.random.split(key)

    N, C, H, W = 2, 4, 16, 16                # inplanes == planes, stride=1
    x = jax.random.normal(k_x, (N, C, H, W), jnp.float32)
    params = _make_params(k_p, C)

    fwd = jax.jit(basic_block_forward)
    out = jax.block_until_ready(fwd(x, params))
    ref = jax.block_until_ready(_ref_forward_nchw(x, params))

    assert out.shape == (N, C, H, W), out.shape
    if not jnp.allclose(out, ref, rtol=5e-3, atol=5e-3):
        err = float(jnp.max(jnp.abs(out - ref)))
        raise AssertionError(
            f"Pallas BasicBlock output mismatch vs JAX reference (max abs err {err})")
    print("KERNEL_OK")
</pallas_src>

<mosaic_0001>
module attributes {stable_mosaic.version = 11 : i64} {
  func.func @kernel(%arg0: i32, %arg1: memref<1x16x256xf32, #tpu.memory_space<vmem>>, %arg2: memref<2x1x256xf32, #tpu.memory_space<vmem>>, %arg3: memref<9x16x16xbf16, #tpu.memory_space<vmem>>, %arg4: memref<9x16x16xbf16, #tpu.memory_space<vmem>>, %arg5: memref<16x1xf32, #tpu.memory_space<vmem>>, %arg6: memref<16x1xf32, #tpu.memory_space<vmem>>, %arg7: memref<16x1xf32, #tpu.memory_space<vmem>>, %arg8: memref<16x1xf32, #tpu.memory_space<vmem>>, %arg9: memref<1x16x256xf32, #tpu.memory_space<vmem>>, %arg10: memref<16x256xbf16, #tpu.memory_space<vmem>>) attributes {dimension_semantics = [#tpu.dimension_semantics<parallel>], iteration_bounds = array<i64: 2>, scalar_prefetch = 0 : i64, scratch_operands = 1 : i64, tpu.core_type = #tpu.core_type<tc>, window_params = [{transform_indices = @transform_0, window_bounds = array<i64: 1, 16, 256>}, {pipeline_mode = #tpu.pipeline_mode<synchronous>, transform_indices = @transform_1, window_bounds = array<i64: 2, 1, 256>}, {pipeline_mode = #tpu.pipeline_mode<synchronous>, transform_indices = @transform_2, window_bounds = array<i64: 9, 16, 16>}, {pipeline_mode = #tpu.pipeline_mode<synchronous>, transform_indices = @transform_3, window_bounds = array<i64: 9, 16, 16>}, {pipeline_mode = #tpu.pipeline_mode<synchronous>, transform_indices = @transform_4, window_bounds = array<i64: 16, 1>}, {pipeline_mode = #tpu.pipeline_mode<synchronous>, transform_indices = @transform_5, window_bounds = array<i64: 16, 1>}, {pipeline_mode = #tpu.pipeline_mode<synchronous>, transform_indices = @transform_6, window_bounds = array<i64: 16, 1>}, {pipeline_mode = #tpu.pipeline_mode<synchronous>, transform_indices = @transform_7, window_bounds = array<i64: 16, 1>}, {transform_indices = @transform_8, window_bounds = array<i64: 1, 16, 256>}]} {
    %cst = arith.constant 0.000000e+00 : bf16
    %0 = vector.broadcast %cst : bf16 to vector<16x17xbf16>
    %c0 = arith.constant 0 : index
    %c0_0 = arith.constant 0 : index
    %c0_1 = arith.constant 0 : index
    %1 = vector.load %arg1[%c0, %c0_0, %c0_1] : memref<1x16x256xf32, #tpu.memory_space<vmem>>, vector<1x16x256xf32>
    %2 = vector.shape_cast %1 : vector<1x16x256xf32> to vector<16x256xf32>
    %3 = arith.truncf %2 : vector<16x256xf32> to vector<16x256xbf16>
    %cst_2 = arith.constant 0.000000e+00 : bf16
    %4 = vector.broadcast %cst_2 : bf16 to vector<16x17xbf16>
    %5 = tpu.concatenate %0, %3, %4 in 1 : vector<16x17xbf16>, vector<16x256xbf16>, vector<16x17xbf16> -> vector<16x290xbf16>
    %6 = vector.extract_strided_slice %5 {offsets = [0, 0], sizes = [16, 256], strides = [1, 1]} : vector<16x290xbf16> to vector<16x256xbf16>
    %c0_3 = arith.constant 0 : index
    %c0_4 = arith.constant 0 : index
    %c0_5 = arith.constant 0 : index
    %7 = vector.load %arg2[%c0_3, %c0_4, %c0_5] : memref<2x1x256xf32, #tpu.memory_space<vmem>>, vector<1x1x256xf32>
    %8 = vector.shape_cast %7 : vector<1x1x256xf32> to vector<1x256xf32>
    %cst_6 = arith.constant 0.000000e+00 : f32
    %9 = vector.broadcast %cst_6 : f32 to vector<1x256xf32>
    %10 = arith.cmpf one, %8, %9 : vector<1x256xf32>
    %cst_7 = arith.constant 0.000000e+00 : bf16
    %11 = vector.shape_cast %10 : vector<1x256xi1> to vector<1x256xi1>
    %12 = vector.broadcast %11 : vector<1x256xi1> to vector<16x256xi1>
    %13 = vector.broadcast %cst_7 : bf16 to vector<16x256xbf16>
    %14 = arith.select %12, %6, %13 : vector<16x256xi1>, vector<16x256xbf16>
    %c0_8 = arith.constant 0 : index
    %c0_9 = arith.constant 0 : index
    %c0_10 = arith.constant 0 : index
    %15 = vector.load %arg3[%c0_8, %c0_9, %c0_10] : memref<9x16x16xbf16, #tpu.memory_space<vmem>>, vector<1x16x16xbf16>
    %16 = vector.shape_cast %15 : vector<1x16x16xbf16> to vector<16x16xbf16>
    %cst_11 = arith.constant dense<0.000000e+00> : vector<16x256xf32>
    %17 = tpu.matmul %16, %14, %cst_11 {dimension_numbers = #tpu.dot_dimension_numbers<[1], [0], [0], [1], [0, 0, 1, 1], [], []>} : vector<16x16xbf16>, vector<16x256xbf16>, vector<16x256xf32> -> vector<16x256xf32>
    %18 = vector.extract_strided_slice %5 {offsets = [0, 1], sizes = [16, 256], strides = [1, 1]} : vector<16x290xbf16> to vector<16x256xbf16>
    %c1 = arith.constant 1 : index
    %c0_12 = arith.constant 0 : index
    %c0_13 = arith.constant 0 : index
    %19 = vector.load %arg3[%c1, %c0_12, %c0_13] : memref<9x16x16xbf16, #tpu.memory_space<vmem>>, vector<1x16x16xbf16>
    %20 = vector.shape_cast %19 : vector<1x16x16xbf16> to vector<16x16xbf16>
    %cst_14 = arith.constant dense<0.000000e+00> : vector<16x256xf32>
    %21 = tpu.matmul %20, %18, %cst_14 {dimension_numbers = #tpu.dot_dimension_numbers<[1], [0], [0], [1], [0, 0, 1, 1], [], []>} : vector<16x16xbf16>, vector<16x256xbf16>, vector<16x256xf32> -> vector<16x256xf32>
    %22 = arith.addf %17, %21 : vector<16x256xf32>
    %23 = vector.extract_strided_slice %5 {offsets = [0, 2], sizes = [16, 256], strides = [1, 1]} : vector<16x290xbf16> to vector<16x256xbf16>
    %c1_15 = arith.constant 1 : index
    %c0_16 = arith.constant 0 : index
    %c0_17 = arith.constant 0 : index
    %24 = vector.load %arg2[%c1_15, %c0_16, %c0_17] : memref<2x1x256xf32, #tpu.memory_space<vmem>>, vector<1x1x256xf32>
    %25 = vector.shape_cast %24 : vector<1x1x256xf32> to vector<1x256xf32>
    %cst_18 = arith.constant 0.000000e+00 : f32
    %26 = vector.broadcast %cst_18 : f32 to vector<1x256xf32>
    %27 = arith.cmpf one, %25, %26 : vector<1x256xf32>
    %cst_19 = arith.constant 0.000000e+00 : bf16
    %28 = vector.shape_cast %27 : vector<1x256xi1> to vector<1x256xi1>
    %29 = vector.broadcast %28 : vector<1x256xi1> to vector<16x256xi1>
    %30 = vector.broadcast %cst_19 : bf16 to vector<16x256xbf16>
    %31 = arith.select %29, %23, %30 : vector<16x256xi1>, vector<16x256xbf16>
    %c2 = arith.constant 2 : index
    %c0_20 = arith.constant 0 : index
    %c0_21 = arith.constant 0 : index
    %32 = vector.load %arg3[%c2, %c0_20, %c0_21] : memref<9x16x16xbf16, #tpu.memory_space<vmem>>, vector<1x16x16xbf16>
    %33 = vector.shape_cast %32 : vector<1x16x16xbf16> to vector<16x16xbf16>
    %cst_22 = arith.constant dense<0.000000e+00> : vector<16x256xf32>
    %34 = tpu.matmul %33, %31, %cst_22 {dimension_numbers = #tpu.dot_dimension_numbers<[1], [0], [0], [1], [0, 0, 1, 1], [], []>} : vector<16x16xbf16>, vector<16x256xbf16>, vector<16x256xf32> -> vector<16x256xf32>
    %35 = arith.addf %22, %34 : vector<16x256xf32>
    %36 = vector.extract_strided_slice %5 {offsets = [0, 16], sizes = [16, 256], strides = [1, 1]} : vector<16x290xbf16> to vector<16x256xbf16>
    %c0_23 = arith.constant 0 : index
    %c0_24 = arith.constant 0 : index
    %c0_25 = arith.constant 0 : index
    %37 = vector.load %arg2[%c0_23, %c0_24, %c0_25] : memref<2x1x256xf32, #tpu.memory_space<vmem>>, vector<1x1x256xf32>
    %38 = vector.shape_cast %37 : vector<1x1x256xf32> to vector<1x256xf32>
    %cst_26 = arith.constant 0.000000e+00 : f32
    %39 = vector.broadcast %cst_26 : f32 to vector<1x256xf32>
    %40 = arith.cmpf one, %38, %39 : vector<1x256xf32>
    %cst_27 = arith.constant 0.000000e+00 : bf16
    %41 = vector.shape_cast %40 : vector<1x256xi1> to vector<1x256xi1>
    %42 = vector.broadcast %41 : vector<1x256xi1> to vector<16x256xi1>
    %43 = vector.broadcast %cst_27 : bf16 to vector<16x256xbf16>
    %44 = arith.select %42, %36, %43 : vector<16x256xi1>, vector<16x256xbf16>
    %c3 = arith.constant 3 : index
    %c0_28 = arith.constant 0 : index
    %c0_29 = arith.constant 0 : index
    %45 = vector.load %arg3[%c3, %c0_28, %c0_29] : memref<9x16x16xbf16, #tpu.memory_space<vmem>>, vector<1x16x16xbf16>
    %46 = vector.shape_cast %45 : vector<1x16x16xbf16> to vector<16x16xbf16>
    %cst_30 = arith.constant dense<0.000000e+00> : vector<16x256xf32>
    %47 = tpu.matmul %46, %44, %cst_30 {dimension_numbers = #tpu.dot_dimension_numbers<[1], [0], [0], [1], [0, 0, 1, 1], [], []>} : vector<16x16xbf16>, vector<16x256xbf16>, vector<16x256xf32> -> vector<16x256xf32>
    %48 = arith.addf %35, %47 : vector<16x256xf32>
    %49 = vector.extract_strided_slice %5 {offsets = [0, 17], sizes = [16, 256], strides = [1, 1]} : vector<16x290xbf16> to vector<16x256xbf16>
    %c4 = arith.constant 4 : index
    %c0_31 = arith.constant 0 : index
    %c0_32 = arith.constant 0 : index
    %50 = vector.load %arg3[%c4, %c0_31, %c0_32] : memref<9x16x16xbf16, #tpu.memory_space<vmem>>, vector<1x16x16xbf16>
    %51 = vector.shape_cast %50 : vector<1x16x16xbf16> to vector<16x16xbf16>
    %cst_33 = arith.constant dense<0.000000e+00> : vector<16x256xf32>
    %52 = tpu.matmul %51, %49, %cst_33 {dimension_numbers = #tpu.dot_dimension_numbers<[1], [0], [0], [1], [0, 0, 1, 1], [], []>} : vector<16x16xbf16>, vector<16x256xbf16>, vector<16x256xf32> -> vector<16x256xf32>
    %53 = arith.addf %48, %52 : vector<16x256xf32>
    %54 = vector.extract_strided_slice %5 {offsets = [0, 18], sizes = [16, 256], strides = [1, 1]} : vector<16x290xbf16> to vector<16x256xbf16>
    %c1_34 = arith.constant 1 : index
    %c0_35 = arith.constant 0 : index
    %c0_36 = arith.constant 0 : index
    %55 = vector.load %arg2[%c1_34, %c0_35, %c0_36] : memref<2x1x256xf32, #tpu.memory_space<vmem>>, vector<1x1x256xf32>
    %56 = vector.shape_cast %55 : vector<1x1x256xf32> to vector<1x256xf32>
    %cst_37 = arith.constant 0.000000e+00 : f32
    %57 = vector.broadcast %cst_37 : f32 to vector<1x256xf32>
    %58 = arith.cmpf one, %56, %57 : vector<1x256xf32>
    %cst_38 = arith.constant 0.000000e+00 : bf16
    %59 = vector.shape_cast %58 : vector<1x256xi1> to vector<1x256xi1>
    %60 = vector.broadcast %59 : vector<1x256xi1> to vector<16x256xi1>
    %61 = vector.broadcast %cst_38 : bf16 to vector<16x256xbf16>
    %62 = arith.select %60, %54, %61 : vector<16x256xi1>, vector<16x256xbf16>
    %c5 = arith.constant 5 : index
    %c0_39 = arith.constant 0 : index
    %c0_40 = arith.constant 0 : index
    %63 = vector.load %arg3[%c5, %c0_39, %c0_40] : memref<9x16x16xbf16, #tpu.memory_space<vmem>>, vector<1x16x16xbf16>
    %64 = vector.shape_cast %63 : vector<1x16x16xbf16> to vector<16x16xbf16>
    %cst_41 = arith.constant dense<0.000000e+00> : vector<16x256xf32>
    %65 = tpu.matmul %64, %62, %cst_41 {dimension_numbers = #tpu.dot_dimension_numbers<[1], [0], [0], [1], [0, 0, 1, 1], [], []>} : vector<16x16xbf16>, vector<16x256xbf16>, vector<16x256xf32> -> vector<16x256xf32>
    %66 = arith.addf %53, %65 : vector<16x256xf32>
    %67 = vector.extract_strided_slice %5 {offsets = [0, 32], sizes = [16, 256], strides = [1, 1]} : vector<16x290xbf16> to vector<16x256xbf16>
    %c0_42 = arith.constant 0 : index
    %c0_43 = arith.constant 0 : index
    %c0_44 = arith.constant 0 : index
    %68 = vector.load %arg2[%c0_42, %c0_43, %c0_44] : memref<2x1x256xf32, #tpu.memory_space<vmem>>, vector<1x1x256xf32>
    %69 = vector.shape_cast %68 : vector<1x1x256xf32> to vector<1x256xf32>
    %cst_45 = arith.constant 0.000000e+00 : f32
    %70 = vector.broadcast %cst_45 : f32 to vector<1x256xf32>
    %71 = arith.cmpf one, %69, %70 : vector<1x256xf32>
    %cst_46 = arith.constant 0.000000e+00 : bf16
    %72 = vector.shape_cast %71 : vector<1x256xi1> to vector<1x256xi1>
    %73 = vector.broadcast %72 : vector<1x256xi1> to vector<16x256xi1>
    %74 = vector.broadcast %cst_46 : bf16 to vector<16x256xbf16>
    %75 = arith.select %73, %67, %74 : vector<16x256xi1>, vector<16x256xbf16>
    %c6 = arith.constant 6 : index
    %c0_47 = arith.constant 0 : index
    %c0_48 = arith.constant 0 : index
    %76 = vector.load %arg3[%c6, %c0_47, %c0_48] : memref<9x16x16xbf16, #tpu.memory_space<vmem>>, vector<1x16x16xbf16>
    %77 = vector.shape_cast %76 : vector<1x16x16xbf16> to vector<16x16xbf16>
    %cst_49 = arith.constant dense<0.000000e+00> : vector<16x256xf32>
    %78 = tpu.matmul %77, %75, %cst_49 {dimension_numbers = #tpu.dot_dimension_numbers<[1], [0], [0], [1], [0, 0, 1, 1], [], []>} : vector<16x16xbf16>, vector<16x256xbf16>, vector<16x256xf32> -> vector<16x256xf32>
    %79 = arith.addf %66, %78 : vector<16x256xf32>
    %80 = vector.extract_strided_slice %5 {offsets = [0, 33], sizes = [16, 256], strides = [1, 1]} : vector<16x290xbf16> to vector<16x256xbf16>
    %c7 = arith.constant 7 : index
    %c0_50 = arith.constant 0 : index
    %c0_51 = arith.constant 0 : index
    %81 = vector.load %arg3[%c7, %c0_50, %c0_51] : memref<9x16x16xbf16, #tpu.memory_space<vmem>>, vector<1x16x16xbf16>
    %82 = vector.shape_cast %81 : vector<1x16x16xbf16> to vector<16x16xbf16>
    %cst_52 = arith.constant dense<0.000000e+00> : vector<16x256xf32>
    %83 = tpu.matmul %82, %80, %cst_52 {dimension_numbers = #tpu.dot_dimension_numbers<[1], [0], [0], [1], [0, 0, 1, 1], [], []>} : vector<16x16xbf16>, vector<16x256xbf16>, vector<16x256xf32> -> vector<16x256xf32>
    %84 = arith.addf %79, %83 : vector<16x256xf32>
    %85 = vector.extract_strided_slice %5 {offsets = [0, 34], sizes = [16, 256], strides = [1, 1]} : vector<16x290xbf16> to vector<16x256xbf16>
    %c1_53 = arith.constant 1 : index
    %c0_54 = arith.constant 0 : index
    %c0_55 = arith.constant 0 : index
    %86 = vector.load %arg2[%c1_53, %c0_54, %c0_55] : memref<2x1x256xf32, #tpu.memory_space<vmem>>, vector<1x1x256xf32>
    %87 = vector.shape_cast %86 : vector<1x1x256xf32> to vector<1x256xf32>
    %cst_56 = arith.constant 0.000000e+00 : f32
    %88 = vector.broadcast %cst_56 : f32 to vector<1x256xf32>
    %89 = arith.cmpf one, %87, %88 : vector<1x256xf32>
    %cst_57 = arith.constant 0.000000e+00 : bf16
    %90 = vector.shape_cast %89 : vector<1x256xi1> to vector<1x256xi1>
    %91 = vector.broadcast %90 : vector<1x256xi1> to vector<16x256xi1>
    %92 = vector.broadcast %cst_57 : bf16 to vector<16x256xbf16>
    %93 = arith.select %91, %85, %92 : vector<16x256xi1>, vector<16x256xbf16>
    %c8 = arith.constant 8 : index
    %c0_58 = arith.constant 0 : index
    %c0_59 = arith.constant 0 : index
    %94 = vector.load %arg3[%c8, %c0_58, %c0_59] : memref<9x16x16xbf16, #tpu.memory_space<vmem>>, vector<1x16x16xbf16>
    %95 = vector.shape_cast %94 : vector<1x16x16xbf16> to vector<16x16xbf16>
    %cst_60 = arith.constant dense<0.000000e+00> : vector<16x256xf32>
    %96 = tpu.matmul %95, %93, %cst_60 {dimension_numbers = #tpu.dot_dimension_numbers<[1], [0], [0], [1], [0, 0, 1, 1], [], []>} : vector<16x16xbf16>, vector<16x256xbf16>, vector<16x256xf32> -> vector<16x256xf32>
    %97 = arith.addf %84, %96 : vector<16x256xf32>
    %c0_61 = arith.constant 0 : index
    %c0_62 = arith.constant 0 : index
    %98 = vector.load %arg5[%c0_61, %c0_62] : memref<16x1xf32, #tpu.memory_space<vmem>>, vector<16x1xf32>
    %99 = vector.broadcast %98 : vector<16x1xf32> to vector<16x256xf32>
    %100 = arith.mulf %97, %99 : vector<16x256xf32>
    %c0_63 = arith.constant 0 : index
    %c0_64 = arith.constant 0 : index
    %101 = vector.load %arg6[%c0_63, %c0_64] : memref<16x1xf32, #tpu.memory_space<vmem>>, vector<16x1xf32>
    %102 = vector.broadcast %101 : vector<16x1xf32> to vector<16x256xf32>
    %103 = arith.addf %100, %102 : vector<16x256xf32>
    %cst_65 = arith.constant 0.000000e+00 : f32
    %104 = vector.broadcast %cst_65 : f32 to vector<16x256xf32>
    %105 = arith.maximumf %103, %104 : vector<16x256xf32>
    %106 = arith.truncf %105 : vector<16x256xf32> to vector<16x256xbf16>
    %c0_66 = arith.constant 0 : index
    %c0_67 = arith.constant 0 : index
    %107 = vector.load %arg10[%c0_66, %c0_67] : memref<16x256xbf16, #tpu.memory_space<vmem>>, vector<16x256xbf16>
    tpu.vector_store %arg10[%c0_66, %c0_67], %106 {strides = array<i32>} : memref<16x256xbf16, #tpu.memory_space<vmem>>, vector<16x256xbf16>,
    %cst_68 = arith.constant 0.000000e+00 : bf16
    %108 = vector.broadcast %cst_68 : bf16 to vector<16x17xbf16>
    %c0_69 = arith.constant 0 : index
    %c0_70 = arith.constant 0 : index
    %109 = vector.load %arg10[%c0_69, %c0_70] : memref<16x256xbf16, #tpu.memory_space<vmem>>, vector<16x256xbf16>
    %cst_71 = arith.constant 0.000000e+00 : bf16
    %110 = vector.broadcast %cst_71 : bf16 to vector<16x17xbf16>
    %111 = tpu.concatenate %108, %109, %110 in 1 : vector<16x17xbf16>, vector<16x256xbf16>, vector<16x17xbf16> -> vector<16x290xbf16>
    %112 = vector.extract_strided_slice %111 {offsets = [0, 0], sizes = [16, 256], strides = [1, 1]} : vector<16x290xbf16> to vector<16x256xbf16>
    %c0_72 = arith.constant 0 : index
    %c0_73 = arith.constant 0 : index
    %c0_74 = arith.constant 0 : index
    %113 = vector.load %arg2[%c0_72, %c0_73, %c0_74] : memref<2x1x256xf32, #tpu.memory_space<vmem>>, vector<1x1x256xf32>
    %114 = vector.shape_cast %113 : vector<1x1x256xf32> to vector<1x256xf32>
    %cst_75 = arith.constant 0.000000e+00 : f32
    %115 = vector.broadcast %cst_75 : f32 to vector<1x256xf32>
    %116 = arith.cmpf one, %114, %115 : vector<1x256xf32>
    %cst_76 = arith.constant 0.000000e+00 : bf16
    %117 = vector.shape_cast %116 : vector<1x256xi1> to vector<1x256xi1>
    %118 = vector.broadcast %117 : vector<1x256xi1> to vector<16x256xi1>
    %119 = vector.broadcast %cst_76 : bf16 to vector<16x256xbf16>
    %120 = arith.select %118, %112, %119 : vector<16x256xi1>, vector<16x256xbf16>
    %c0_77 = arith.constant 0 : index
    %c0_78 = arith.constant 0 : index
    %c0_79 = arith.constant 0 : index
    %121 = vector.load %arg4[%c0_77, %c0_78, %c0_79] : memref<9x16x16xbf16, #tpu.memory_space<vmem>>, vector<1x16x16xbf16>
    %122 = vector.shape_cast %121 : vector<1x16x16xbf16> to vector<16x16xbf16>
    %cst_80 = arith.constant dense<0.000000e+00> : vector<16x256xf32>
    %123 = tpu.matmul %122, %120, %cst_80 {dimension_numbers = #tpu.dot_dimension_numbers<[1], [0], [0], [1], [0, 0, 1, 1], [], []>} : vector<16x16xbf16>, vector<16x256xbf16>, vector<16x256xf32> -> vector<16x256xf32>
    %124 = vector.extract_strided_slice %111 {offsets = [0, 1], sizes = [16, 256], strides = [1, 1]} : vector<16x290xbf16> to vector<16x256xbf16>
    %c1_81 = arith.constant 1 : index
    %c0_82 = arith.constant 0 : index
    %c0_83 = arith.constant 0 : index
    %125 = vector.load %arg4[%c1_81, %c0_82, %c0_83] : memref<9x16x16xbf16, #tpu.memory_space<vmem>>, vector<1x16x16xbf16>
    %126 = vector.shape_cast %125 : vector<1x16x16xbf16> to vector<16x16xbf16>
    %cst_84 = arith.constant dense<0.000000e+00> : vector<16x256xf32>
    %127 = tpu.matmul %126, %124, %cst_84 {dimension_numbers = #tpu.dot_dimension_numbers<[1], [0], [0], [1], [0, 0, 1, 1], [], []>} : vector<16x16xbf16>, vector<16x256xbf16>, vector<16x256xf32> -> vector<16x256xf32>
    %128 = arith.addf %123, %127 : vector<16x256xf32>
    %129 = vector.extract_strided_slice %111 {offsets = [0, 2], sizes = [16, 256], strides = [1, 1]} : vector<16x290xbf16> to vector<16x256xbf16>
    %c1_85 = arith.constant 1 : index
    %c0_86 = arith.constant 0 : index
    %c0_87 = arith.constant 0 : index
    %130 = vector.load %arg2[%c1_85, %c0_86, %c0_87] : memref<2x1x256xf32, #tpu.memory_space<vmem>>, vector<1x1x256xf32>
    %131 = vector.shape_cast %130 : vector<1x1x256xf32> to vector<1x256xf32>
    %cst_88 = arith.constant 0.000000e+00 : f32
    %132 = vector.broadcast %cst_88 : f32 to vector<1x256xf32>
    %133 = arith.cmpf one, %131, %132 : vector<1x256xf32>
    %cst_89 = arith.constant 0.000000e+00 : bf16
    %134 = vector.shape_cast %133 : vector<1x256xi1> to vector<1x256xi1>
    %135 = vector.broadcast %134 : vector<1x256xi1> to vector<16x256xi1>
    %136 = vector.broadcast %cst_89 : bf16 to vector<16x256xbf16>
    %137 = arith.select %135, %129, %136 : vector<16x256xi1>, vector<16x256xbf16>
    %c2_90 = arith.constant 2 : index
    %c0_91 = arith.constant 0 : index
    %c0_92 = arith.constant 0 : index
    %138 = vector.load %arg4[%c2_90, %c0_91, %c0_92] : memref<9x16x16xbf16, #tpu.memory_space<vmem>>, vector<1x16x16xbf16>
    %139 = vector.shape_cast %138 : vector<1x16x16xbf16> to vector<16x16xbf16>
    %cst_93 = arith.constant dense<0.000000e+00> : vector<16x256xf32>
    %140 = tpu.matmul %139, %137, %cst_93 {dimension_numbers = #tpu.dot_dimension_numbers<[1], [0], [0], [1], [0, 0, 1, 1], [], []>} : vector<16x16xbf16>, vector<16x256xbf16>, vector<16x256xf32> -> vector<16x256xf32>
    %141 = arith.addf %128, %140 : vector<16x256xf32>
    %142 = vector.extract_strided_slice %111 {offsets = [0, 16], sizes = [16, 256], strides = [1, 1]} : vector<16x290xbf16> to vector<16x256xbf16>
    %c0_94 = arith.constant 0 : index
    %c0_95 = arith.constant 0 : index
    %c0_96 = arith.constant 0 : index
    %143 = vector.load %arg2[%c0_94, %c0_95, %c0_96] : memref<2x1x256xf32, #tpu.memory_space<vmem>>, vector<1x1x256xf32>
    %144 = vector.shape_cast %143 : vector<1x1x256xf32> to vector<1x256xf32>
    %cst_97 = arith.constant 0.000000e+00 : f32
    %145 = vector.broadcast %cst_97 : f32 to vector<1x256xf32>
    %146 = arith.cmpf one, %144, %145 : vector<1x256xf32>
    %cst_98 = arith.constant 0.000000e+00 : bf16
    %147 = vector.shape_cast %146 : vector<1x256xi1> to vector<1x256xi1>
    %148 = vector.broadcast %147 : vector<1x256xi1> to vector<16x256xi1>
    %149 = vector.broadcast %cst_98 : bf16 to vector<16x256xbf16>
    %150 = arith.select %148, %142, %149 : vector<16x256xi1>, vector<16x256xbf16>
    %c3_99 = arith.constant 3 : index
    %c0_100 = arith.constant 0 : index
    %c0_101 = arith.constant 0 : index
    %151 = vector.load %arg4[%c3_99, %c0_100, %c0_101] : memref<9x16x16xbf16, #tpu.memory_space<vmem>>, vector<1x16x16xbf16>
    %152 = vector.shape_cast %151 : vector<1x16x16xbf16> to vector<16x16xbf16>
    %cst_102 = arith.constant dense<0.000000e+00> : vector<16x256xf32>
    %153 = tpu.matmul %152, %150, %cst_102 {dimension_numbers = #tpu.dot_dimension_numbers<[1], [0], [0], [1], [0, 0, 1, 1], [], []>} : vector<16x16xbf16>, vector<16x256xbf16>, vector<16x256xf32> -> vector<16x256xf32>
    %154 = arith.addf %141, %153 : vector<16x256xf32>
    %155 = vector.extract_strided_slice %111 {offsets = [0, 17], sizes = [16, 256], strides = [1, 1]} : vector<16x290xbf16> to vector<16x256xbf16>
    %c4_103 = arith.constant 4 : index
    %c0_104 = arith.constant 0 : index
    %c0_105 = arith.constant 0 : index
    %156 = vector.load %arg4[%c4_103, %c0_104, %c0_105] : memref<9x16x16xbf16, #tpu.memory_space<vmem>>, vector<1x16x16xbf16>
    %157 = vector.shape_cast %156 : vector<1x16x16xbf16> to vector<16x16xbf16>
    %cst_106 = arith.constant dense<0.000000e+00> : vector<16x256xf32>
    %158 = tpu.matmul %157, %155, %cst_106 {dimension_numbers = #tpu.dot_dimension_numbers<[1], [0], [0], [1], [0, 0, 1, 1], [], []>} : vector<16x16xbf16>, vector<16x256xbf16>, vector<16x256xf32> -> vector<16x256xf32>
    %159 = arith.addf %154, %158 : vector<16x256xf32>
    %160 = vector.extract_strided_slice %111 {offsets = [0, 18], sizes = [16, 256], strides = [1, 1]} : vector<16x290xbf16> to vector<16x256xbf16>
    %c1_107 = arith.constant 1 : index
    %c0_108 = arith.constant 0 : index
    %c0_109 = arith.constant 0 : index
    %161 = vector.load %arg2[%c1_107, %c0_108, %c0_109] : memref<2x1x256xf32, #tpu.memory_space<vmem>>, vector<1x1x256xf32>
    %162 = vector.shape_cast %161 : vector<1x1x256xf32> to vector<1x256xf32>
    %cst_110 = arith.constant 0.000000e+00 : f32
    %163 = vector.broadcast %cst_110 : f32 to vector<1x256xf32>
    %164 = arith.cmpf one, %162, %163 : vector<1x256xf32>
    %cst_111 = arith.constant 0.000000e+00 : bf16
    %165 = vector.shape_cast %164 : vector<1x256xi1> to vector<1x256xi1>
    %166 = vector.broadcast %165 : vector<1x256xi1> to vector<16x256xi1>
    %167 = vector.broadcast %cst_111 : bf16 to vector<16x256xbf16>
    %168 = arith.select %166, %160, %167 : vector<16x256xi1>, vector<16x256xbf16>
    %c5_112 = arith.constant 5 : index
    %c0_113 = arith.constant 0 : index
    %c0_114 = arith.constant 0 : index
    %169 = vector.load %arg4[%c5_112, %c0_113, %c0_114] : memref<9x16x16xbf16, #tpu.memory_space<vmem>>, vector<1x16x16xbf16>
    %170 = vector.shape_cast %169 : vector<1x16x16xbf16> to vector<16x16xbf16>
    %cst_115 = arith.constant dense<0.000000e+00> : vector<16x256xf32>
    %171 = tpu.matmul %170, %168, %cst_115 {dimension_numbers = #tpu.dot_dimension_numbers<[1], [0], [0], [1], [0, 0, 1, 1], [], []>} : vector<16x16xbf16>, vector<16x256xbf16>, vector<16x256xf32> -> vector<16x256xf32>
    %172 = arith.addf %159, %171 : vector<16x256xf32>
    %173 = vector.extract_strided_slice %111 {offsets = [0, 32], sizes = [16, 256], strides = [1, 1]} : vector<16x290xbf16> to vector<16x256xbf16>
    %c0_116 = arith.constant 0 : index
    %c0_117 = arith.constant 0 : index
    %c0_118 = arith.constant 0 : index
    %174 = vector.load %arg2[%c0_116, %c0_117, %c0_118] : memref<2x1x256xf32, #tpu.memory_space<vmem>>, vector<1x1x256xf32>
    %175 = vector.shape_cast %174 : vector<1x1x256xf32> to vector<1x256xf32>
    %cst_119 = arith.constant 0.000000e+00 : f32
    %176 = vector.broadcast %cst_119 : f32 to vector<1x256xf32>
    %177 = arith.cmpf one, %175, %176 : vector<1x256xf32>
    %cst_120 = arith.constant 0.000000e+00 : bf16
    %178 = vector.shape_cast %177 : vector<1x256xi1> to vector<1x256xi1>
    %179 = vector.broadcast %178 : vector<1x256xi1> to vector<16x256xi1>
    %180 = vector.broadcast %cst_120 : bf16 to vector<16x256xbf16>
    %181 = arith.select %179, %173, %180 : vector<16x256xi1>, vector<16x256xbf16>
    %c6_121 = arith.constant 6 : index
    %c0_122 = arith.constant 0 : index
    %c0_123 = arith.constant 0 : index
    %182 = vector.load %arg4[%c6_121, %c0_122, %c0_123] : memref<9x16x16xbf16, #tpu.memory_space<vmem>>, vector<1x16x16xbf16>
    %183 = vector.shape_cast %182 : vector<1x16x16xbf16> to vector<16x16xbf16>
    %cst_124 = arith.constant dense<0.000000e+00> : vector<16x256xf32>
    %184 = tpu.matmul %183, %181, %cst_124 {dimension_numbers = #tpu.dot_dimension_numbers<[1], [0], [0], [1], [0, 0, 1, 1], [], []>} : vector<16x16xbf16>, vector<16x256xbf16>, vector<16x256xf32> -> vector<16x256xf32>
    %185 = arith.addf %172, %184 : vector<16x256xf32>
    %186 = vector.extract_strided_slice %111 {offsets = [0, 33], sizes = [16, 256], strides = [1, 1]} : vector<16x290xbf16> to vector<16x256xbf16>
    %c7_125 = arith.constant 7 : index
    %c0_126 = arith.constant 0 : index
    %c0_127 = arith.constant 0 : index
    %187 = vector.load %arg4[%c7_125, %c0_126, %c0_127] : memref<9x16x16xbf16, #tpu.memory_space<vmem>>, vector<1x16x16xbf16>
    %188 = vector.shape_cast %187 : vector<1x16x16xbf16> to vector<16x16xbf16>
    %cst_128 = arith.constant dense<0.000000e+00> : vector<16x256xf32>
    %189 = tpu.matmul %188, %186, %cst_128 {dimension_numbers = #tpu.dot_dimension_numbers<[1], [0], [0], [1], [0, 0, 1, 1], [], []>} : vector<16x16xbf16>, vector<16x256xbf16>, vector<16x256xf32> -> vector<16x256xf32>
    %190 = arith.addf %185, %189 : vector<16x256xf32>
    %191 = vector.extract_strided_slice %111 {offsets = [0, 34], sizes = [16, 256], strides = [1, 1]} : vector<16x290xbf16> to vector<16x256xbf16>
    %c1_129 = arith.constant 1 : index
    %c0_130 = arith.constant 0 : index
    %c0_131 = arith.constant 0 : index
    %192 = vector.load %arg2[%c1_129, %c0_130, %c0_131] : memref<2x1x256xf32, #tpu.memory_space<vmem>>, vector<1x1x256xf32>
    %193 = vector.shape_cast %192 : vector<1x1x256xf32> to vector<1x256xf32>
    %cst_132 = arith.constant 0.000000e+00 : f32
    %194 = vector.broadcast %cst_132 : f32 to vector<1x256xf32>
    %195 = arith.cmpf one, %193, %194 : vector<1x256xf32>
    %cst_133 = arith.constant 0.000000e+00 : bf16
    %196 = vector.shape_cast %195 : vector<1x256xi1> to vector<1x256xi1>
    %197 = vector.broadcast %196 : vector<1x256xi1> to vector<16x256xi1>
    %198 = vector.broadcast %cst_133 : bf16 to vector<16x256xbf16>
    %199 = arith.select %197, %191, %198 : vector<16x256xi1>, vector<16x256xbf16>
    %c8_134 = arith.constant 8 : index
    %c0_135 = arith.constant 0 : index
    %c0_136 = arith.constant 0 : index
    %200 = vector.load %arg4[%c8_134, %c0_135, %c0_136] : memref<9x16x16xbf16, #tpu.memory_space<vmem>>, vector<1x16x16xbf16>
    %201 = vector.shape_cast %200 : vector<1x16x16xbf16> to vector<16x16xbf16>
    %cst_137 = arith.constant dense<0.000000e+00> : vector<16x256xf32>
    %202 = tpu.matmul %201, %199, %cst_137 {dimension_numbers = #tpu.dot_dimension_numbers<[1], [0], [0], [1], [0, 0, 1, 1], [], []>} : vector<16x16xbf16>, vector<16x256xbf16>, vector<16x256xf32> -> vector<16x256xf32>
    %203 = arith.addf %190, %202 : vector<16x256xf32>
    %c0_138 = arith.constant 0 : index
    %c0_139 = arith.constant 0 : index
    %204 = vector.load %arg7[%c0_138, %c0_139] : memref<16x1xf32, #tpu.memory_space<vmem>>, vector<16x1xf32>
    %205 = vector.broadcast %204 : vector<16x1xf32> to vector<16x256xf32>
    %206 = arith.mulf %203, %205 : vector<16x256xf32>
    %c0_140 = arith.constant 0 : index
    %c0_141 = arith.constant 0 : index
    %207 = vector.load %arg8[%c0_140, %c0_141] : memref<16x1xf32, #tpu.memory_space<vmem>>, vector<16x1xf32>
    %208 = vector.broadcast %207 : vector<16x1xf32> to vector<16x256xf32>
    %209 = arith.addf %206, %208 : vector<16x256xf32>
    %c0_142 = arith.constant 0 : index
    %c0_143 = arith.constant 0 : index
    %c0_144 = arith.constant 0 : index
    %210 = vector.load %arg1[%c0_142, %c0_143, %c0_144] : memref<1x16x256xf32, #tpu.memory_space<vmem>>, vector<1x16x256xf32>
    %211 = vector.shape_cast %210 : vector<1x16x256xf32> to vector<16x256xf32>
    %212 = arith.addf %209, %211 : vector<16x256xf32>
    %cst_145 = arith.constant 0.000000e+00 : f32
    %213 = vector.broadcast %cst_145 : f32 to vector<16x256xf32>
    %214 = arith.maximumf %212, %213 : vector<16x256xf32>
    %c0_146 = arith.constant 0 : index
    %c0_147 = arith.constant 0 : index
    %c0_148 = arith.constant 0 : index
    %215 = vector.load %arg9[%c0_146, %c0_147, %c0_148] : memref<1x16x256xf32, #tpu.memory_space<vmem>>, vector<1x16x256xf32>
    %216 = vector.shape_cast %215 : vector<1x16x256xf32> to vector<16x256xf32>
    %217 = vector.shape_cast %214 : vector<16x256xf32> to vector<1x16x256xf32>
    tpu.vector_store %arg9[%c0_146, %c0_147, %c0_148], %217 {strides = array<i32>} : memref<1x16x256xf32, #tpu.memory_space<vmem>>, vector<1x16x256xf32>,
    return
  }
  func.func @transform_0(%arg0: i32) -> (i32, i32, i32) {
    %c0_i32 = arith.constant 0 : i32
    %c0_i32_0 = arith.constant 0 : i32
    %c0_i32_1 = arith.constant 0 : i32
    return %arg0, %c0_i32, %c0_i32_0 : i32, i32, i32
  }
  func.func @transform_1(%arg0: i32) -> (i32, i32, i32) {
    %c0_i32 = arith.constant 0 : i32
    %c0_i32_0 = arith.constant 0 : i32
    %c0_i32_1 = arith.constant 0 : i32
    %c0_i32_2 = arith.constant 0 : i32
    return %c0_i32, %c0_i32_0, %c0_i32_1 : i32, i32, i32
  }
  func.func @transform_2(%arg0: i32) -> (i32, i32, i32) {
    %c0_i32 = arith.constant 0 : i32
    %c0_i32_0 = arith.constant 0 : i32
    %c0_i32_1 = arith.constant 0 : i32
    %c0_i32_2 = arith.constant 0 : i32
    return %c0_i32, %c0_i32_0, %c0_i32_1 : i32, i32, i32
  }
  func.func @transform_3(%arg0: i32) -> (i32, i32, i32) {
    %c0_i32 = arith.constant 0 : i32
    %c0_i32_0 = arith.constant 0 : i32
    %c0_i32_1 = arith.constant 0 : i32
    %c0_i32_2 = arith.constant 0 : i32
    return %c0_i32, %c0_i32_0, %c0_i32_1 : i32, i32, i32
  }
  func.func @transform_4(%arg0: i32) -> (i32, i32) {
    %c0_i32 = arith.constant 0 : i32
    %c0_i32_0 = arith.constant 0 : i32
    %c0_i32_1 = arith.constant 0 : i32
    return %c0_i32, %c0_i32_0 : i32, i32
  }
  func.func @transform_5(%arg0: i32) -> (i32, i32) {
    %c0_i32 = arith.constant 0 : i32
    %c0_i32_0 = arith.constant 0 : i32
    %c0_i32_1 = arith.constant 0 : i32
    return %c0_i32, %c0_i32_0 : i32, i32
  }
  func.func @transform_6(%arg0: i32) -> (i32, i32) {
    %c0_i32 = arith.constant 0 : i32
    %c0_i32_0 = arith.constant 0 : i32
    %c0_i32_1 = arith.constant 0 : i32
    return %c0_i32, %c0_i32_0 : i32, i32
  }
  func.func @transform_7(%arg0: i32) -> (i32, i32) {
    %c0_i32 = arith.constant 0 : i32
    %c0_i32_0 = arith.constant 0 : i32
    %c0_i32_1 = arith.constant 0 : i32
    return %c0_i32, %c0_i32_0 : i32, i32
  }
  func.func @transform_8(%arg0: i32) -> (i32, i32, i32) {
    %c0_i32 = arith.constant 0 : i32
    %c0_i32_0 = arith.constant 0 : i32
    %c0_i32_1 = arith.constant 0 : i32
    return %arg0, %c0_i32, %c0_i32_0 : i32, i32, i32
  }
}

</mosaic_0001>

<llo_original>
// kernel: basic_block_forward.1
$region0: #{basic_block_forward.1}
  #allocation0 [shape = 'u32[]', space=smem, size = 0x4, offset = 0x4, fixed_abs, tag = 'smem constant byte address 0x4 - core index']
  #allocation1 [shape = 'u32[72,128]{1,0:T(1,128)}', space=vmem, size = 0x9000, scoped, tag = 'internal scratch']
  #allocation2 [shape = 'bf16[16,256]{1,0:T(8,128)(2,1)}', space=vmem, size = 0x2000, scoped, tag = 'scratch operand']
  %s0 = inlined_call_operand.vmem [shape: f32[2,16,256], index: 0, kind: input, shape index: {}]
  %s1 = inlined_call_operand.vmem [shape: f32[2,1,256], index: 1, kind: input, shape index: {}]
  %s2 = inlined_call_operand.vmem [shape: bf16[9,16,16], index: 2, kind: input, shape index: {}]
  %s3 = inlined_call_operand.vmem [shape: bf16[9,16,16], index: 3, kind: input, shape index: {}]
  %s4 = inlined_call_operand.vmem [shape: f32[16,1], index: 4, kind: input, shape index: {}]
  %s5 = inlined_call_operand.vmem [shape: f32[16,1], index: 5, kind: input, shape index: {}]
  %s6 = inlined_call_operand.vmem [shape: f32[16,1], index: 6, kind: input, shape index: {}]
  %s7 = inlined_call_operand.vmem [shape: f32[16,1], index: 7, kind: input, shape index: {}]
  %s8 = inlined_call_operand.vmem [shape: f32[2,16,256], index: 8, kind: output, shape index: {}]
  %s9 = sld [smem:[#allocation0]]
  $region65: #{basic_block_forward.1} parent=0
    _
  %s11 = ssub.s32 1, %s9
  %s12 = scalar_select 0, %s11, %s9
  loop: start=0, step=1, limit=4
  $region2: #{basic_block_forward.1} parent=0 // loop_pre_header
    _
  $region3: #{basic_block_forward.1} parent=0 // loop_header
    %s14 = sphi 0, %s18
    %p15 = scmp.ge.s32.totalorder %s14, 4
    %s24 = sphi 0, %s26
    %s27 = sphi 0, %s24
    %s28 = sphi 0, %s27
    %s44 = sphi 0, %s28
    %s48 = sphi 0, %s48
    %s50 = sphi 0, %s48
    %s51 = sphi 0, %s50
    %s65 = sphi 0, %s51
    %s69 = sphi 0, %s69
    %s71 = sphi 0, %s69
    %s72 = sphi 0, %s71
    %s86 = sphi 0, %s72
    %s90 = sphi 0, %s90
    %s92 = sphi 0, %s90
    %s93 = sphi 0, %s92
    %s107 = sphi 0, %s93
    %s111 = sphi 0, %s111
    %s113 = sphi 0, %s111
    %s114 = sphi 0, %s113
    %s128 = sphi 0, %s114
    %s132 = sphi 0, %s132
    %s134 = sphi 0, %s132
    %s135 = sphi 0, %s134
    %s149 = sphi 0, %s135
    %s153 = sphi 0, %s153
    %s155 = sphi 0, %s153
    %s156 = sphi 0, %s155
    %s170 = sphi 0, %s156
    %s174 = sphi 0, %s174
    %s176 = sphi 0, %s174
    %s177 = sphi 0, %s176
    %s191 = sphi 0, %s177
    %s197 = sphi 0, %s199
    %s200 = sphi 0, %s197
    %s201 = sphi 0, %s200
    %s217 = sphi 0, %s201
  $region4: #{basic_block_forward.1} parent=0 // loop_header_branch
    %17 = sbr.rel (%p15) target = $region8
  $region5: #{basic_block_forward.1} parent=0 // loop_body
    %s19 = ssub.s32 %s14, 1
    %s20 = ssub.s32 %s14, 2
    %s21 = sadd.s32 %s14, 1
    %s22 = ssub.s32 %s14, %s21
    %p23 = scmp.eq.s32.totalorder %s22, 0
    %s25 = sadd.s32 %s24, 1
    %s26 = scalar_select %p23, %s24, %s25
    %p29 = pneg %p23
    %p30 = scmp.eq.s32.totalorder %s14, 1
    %p31 = por %p29, %p30
    %p32 = scmp.ne.s32.totalorder %s24, %s27
    %p33 = scmp.eq.s32.totalorder %s14, 0
    %p34 = por %p32, %p33
    %p35 = scmp.ne.s32.totalorder %s24, %s27
    %p36 = scmp.eq.s32.totalorder %s19, 1
    %p37 = por %p35, %p36
    %p38 = scmp.ne.s32.totalorder %s27, %s28
    %p39 = scmp.eq.s32.totalorder %s19, 0
    %p40 = por %p38, %p39
    %p41 = scmp.ne.s32.totalorder %s27, %s28
    %p42 = scmp.eq.s32.totalorder %s20, 1
    %p43 = por %p41, %p42
    %p45 = scmp.ne.s32.totalorder %s28, %s44
    %p46 = scmp.eq.s32.totalorder %s20, 0
    %p47 = por %p45, %p46
    %s49 = sadd.s32 %s48, 1
    %p52 = scmp.eq.s32.totalorder %s14, 1
    %p53 = scmp.ne.s32.totalorder %s48, %s50
    %p54 = scmp.eq.s32.totalorder %s14, 0
    %p55 = por %p53, %p54
    %p56 = scmp.ne.s32.totalorder %s48, %s50
    %p57 = scmp.eq.s32.totalorder %s19, 1
    %p58 = por %p56, %p57
    %p59 = scmp.ne.s32.totalorder %s50, %s51
    %p60 = scmp.eq.s32.totalorder %s19, 0
    %p61 = por %p59, %p60
    %p62 = scmp.ne.s32.totalorder %s50, %s51
    %p63 = scmp.eq.s32.totalorder %s20, 1
    %p64 = por %p62, %p63
    %p66 = scmp.ne.s32.totalorder %s51, %s65
    %p67 = scmp.eq.s32.totalorder %s20, 0
    %p68 = por %p66, %p67
    %s70 = sadd.s32 %s69, 1
    %p73 = scmp.eq.s32.totalorder %s14, 1
    %p74 = scmp.ne.s32.totalorder %s69, %s71
    %p75 = scmp.eq.s32.totalorder %s14, 0
    %p76 = por %p74, %p75
    %p77 = scmp.ne.s32.totalorder %s69, %s71
    %p78 = scmp.eq.s32.totalorder %s19, 1
    %p79 = por %p77, %p78
    %p80 = scmp.ne.s32.totalorder %s71, %s72
    %p81 = scmp.eq.s32.totalorder %s19, 0
    %p82 = por %p80, %p81
    %p83 = scmp.ne.s32.totalorder %s71, %s72
    %p84 = scmp.eq.s32.totalorder %s20, 1
    %p85 = por %p83, %p84
    %p87 = scmp.ne.s32.totalorder %s72, %s86
    %p88 = scmp.eq.s32.totalorder %s20, 0
    %p89 = por %p87, %p88
    %s91 = sadd.s32 %s90, 1
    %p94 = scmp.eq.s32.totalorder %s14, 1
    %p95 = scmp.ne.s32.totalorder %s90, %s92
    %p96 = scmp.eq.s32.totalorder %s14, 0
    %p97 = por %p95, %p96
    %p98 = scmp.ne.s32.totalorder %s90, %s92
    %p99 = scmp.eq.s32.totalorder %s19, 1
    %p100 = por %p98, %p99
    %p101 = scmp.ne.s32.totalorder %s92, %s93
    %p102 = scmp.eq.s32.totalorder %s19, 0
    %p103 = por %p101, %p102
    %p104 = scmp.ne.s32.totalorder %s92, %s93
    %p105 = scmp.eq.s32.totalorder %s20, 1
    %p106 = por %p104, %p105
    %p108 = scmp.ne.s32.totalorder %s93, %s107
    %p109 = scmp.eq.s32.totalorder %s20, 0
    %p110 = por %p108, %p109
    %s112 = sadd.s32 %s111, 1
    %p115 = scmp.eq.s32.totalorder %s14, 1
    %p116 = scmp.ne.s32.totalorder %s111, %s113
    %p117 = scmp.eq.s32.totalorder %s14, 0
    %p118 = por %p116, %p117
    %p119 = scmp.ne.s32.totalorder %s111, %s113
    %p120 = scmp.eq.s32.totalorder %s19, 1
    %p121 = por %p119, %p120
    %p122 = scmp.ne.s32.totalorder %s113, %s114
    %p123 = scmp.eq.s32.totalorder %s19, 0
    %p124 = por %p122, %p123
    %p125 = scmp.ne.s32.totalorder %s113, %s114
    %p126 = scmp.eq.s32.totalorder %s20, 1
    %p127 = por %p125, %p126
    %p129 = scmp.ne.s32.totalorder %s114, %s128
    %p130 = scmp.eq.s32.totalorder %s20, 0
    %p131 = por %p129, %p130
    %s133 = sadd.s32 %s132, 1
    %p136 = scmp.eq.s32.totalorder %s14, 1
    %p137 = scmp.ne.s32.totalorder %s132, %s134
    %p138 = scmp.eq.s32.totalorder %s14, 0
    %p139 = por %p137, %p138
    %p140 = scmp.ne.s32.totalorder %s132, %s134
    %p141 = scmp.eq.s32.totalorder %s19, 1
    %p142 = por %p140, %p141
    %p143 = scmp.ne.s32.totalorder %s134, %s135
    %p144 = scmp.eq.s32.totalorder %s19, 0
    %p145 = por %p143, %p144
    %p146 = scmp.ne.s32.totalorder %s134, %s135
    %p147 = scmp.eq.s32.totalorder %s20, 1
    %p148 = por %p146, %p147
    %p150 = scmp.ne.s32.totalorder %s135, %s149
    %p151 = scmp.eq.s32.totalorder %s20, 0
    %p152 = por %p150, %p151
    %s154 = sadd.s32 %s153, 1
    %p157 = scmp.eq.s32.totalorder %s14, 1
    %p158 = scmp.ne.s32.totalorder %s153, %s155
    %p159 = scmp.eq.s32.totalorder %s14, 0
    %p160 = por %p158, %p159
    %p161 = scmp.ne.s32.totalorder %s153, %s155
    %p162 = scmp.eq.s32.totalorder %s19, 1
    %p163 = por %p161, %p162
    %p164 = scmp.ne.s32.totalorder %s155, %s156
    %p165 = scmp.eq.s32.totalorder %s19, 0
    %p166 = por %p164, %p165
    %p167 = scmp.ne.s32.totalorder %s155, %s156
    %p168 = scmp.eq.s32.totalorder %s20, 1
    %p169 = por %p167, %p168
    %p171 = scmp.ne.s32.totalorder %s156, %s170
    %p172 = scmp.eq.s32.totalorder %s20, 0
    %p173 = por %p171, %p172
    %s175 = sadd.s32 %s174, 1
    %p178 = scmp.eq.s32.totalorder %s14, 1
    %p179 = scmp.ne.s32.totalorder %s174, %s176
    %p180 = scmp.eq.s32.totalorder %s14, 0
    %p181 = por %p179, %p180
    %p182 = scmp.ne.s32.totalorder %s174, %s176
    %p183 = scmp.eq.s32.totalorder %s19, 1
    %p184 = por %p182, %p183
    %p185 = scmp.ne.s32.totalorder %s176, %s177
    %p186 = scmp.eq.s32.totalorder %s19, 0
    %p187 = por %p185, %p186
    %p188 = scmp.ne.s32.totalorder %s176, %s177
    %p189 = scmp.eq.s32.totalorder %s20, 1
    %p190 = por %p188, %p189
    %p192 = scmp.ne.s32.totalorder %s177, %s191
    %p193 = scmp.eq.s32.totalorder %s20, 0
    %p194 = por %p192, %p193
    %s195 = ssub.s32 %s14, %s21
    %p196 = scmp.eq.s32.totalorder %s195, 0
    %s198 = sadd.s32 %s197, 1
    %s199 = scalar_select %p196, %s197, %s198
    %p202 = pneg %p196
    %p203 = scmp.eq.s32.totalorder %s14, 1
    %p204 = por %p202, %p203
    %p205 = scmp.ne.s32.totalorder %s197, %s200
    %p206 = scmp.eq.s32.totalorder %s14, 0
    %p207 = por %p205, %p206
    %p208 = scmp.ne.s32.totalorder %s197, %s200
    %p209 = scmp.eq.s32.totalorder %s19, 1
    %p210 = por %p208, %p209
    %p211 = scmp.ne.s32.totalorder %s200, %s201
    %p212 = scmp.eq.s32.totalorder %s19, 0
    %p213 = por %p211, %p212
    %p214 = scmp.ne.s32.totalorder %s200, %s201
    %p215 = scmp.eq.s32.totalorder %s20, 1
    %p216 = por %p214, %p215
    %p218 = scmp.ne.s32.totalorder %s201, %s217
    %p219 = scmp.eq.s32.totalorder %s20, 0
    %p220 = por %p218, %p219
    %p221 = scmp.le.s32.totalorder 1, %s14
    %p222 = scmp.lt.s32.totalorder %s14, 3
    %p223 = pnand %p221, %p222
    %p224 = pneg %p223
    // Predicated region
    $region9: #{basic_block_forward.1} parent=5 // pred_check
      _
    $region10: #{basic_block_forward.1} parent=5 // pred_check_branch
      %226 = sbr.rel (%p223) target = $region12
    $region11: #{basic_block_forward.1} parent=5 // pred_region
      %s227 = ssub.s32 %s14, 1
      // Predicated region
      $region13: #{basic_block_forward.1} parent=11 // pred_check
        %p228 = pneg %p61
      $region14: #{basic_block_forward.1} parent=11 // pred_check_branch
        %230 = sbr.rel (%p228) target = $region16
      $region15: #{basic_block_forward.1} parent=11 // pred_region
        _
      $region16: #{basic_block_forward.1} parent=11 // pred_fallthru
        _
      // Predicated region
      $region17: #{basic_block_forward.1} parent=11 // pred_check
        %p231 = pneg %p82
      $region18: #{basic_block_forward.1} parent=11 // pred_check_branch
        %233 = sbr.rel (%p231) target = $region20
      $region19: #{basic_block_forward.1} parent=11 // pred_region
        _
      $region20: #{basic_block_forward.1} parent=11 // pred_fallthru
        _
      // Predicated region
      $region21: #{basic_block_forward.1} parent=11 // pred_check
        %p234 = pneg %p103
      $region22: #{basic_block_forward.1} parent=11 // pred_check_branch
        %236 = sbr.rel (%p234) target = $region24
      $region23: #{basic_block_forward.1} parent=11 // pred_region
        _
      $region24: #{basic_block_forward.1} parent=11 // pred_fallthru
        _
      // Predicated region
      $region25: #{basic_block_forward.1} parent=11 // pred_check
        %p237 = pneg %p124
      $region26: #{basic_block_forward.1} parent=11 // pred_check_branch
        %239 = sbr.rel (%p237) target = $region28
      $region27: #{basic_block_forward.1} parent=11 // pred_region
        _
      $region28: #{basic_block_forward.1} parent=11 // pred_fallthru
        _
      // Predicated region
      $region29: #{basic_block_forward.1} parent=11 // pred_check
        %p240 = pneg %p145
      $region30: #{basic_block_forward.1} parent=11 // pred_check_branch
        %242 = sbr.rel (%p240) target = $region32
      $region31: #{basic_block_forward.1} parent=11 // pred_region
        _
      $region32: #{basic_block_forward.1} parent=11 // pred_fallthru
        _
      // Predicated region
      $region33: #{basic_block_forward.1} parent=11 // pred_check
        %p243 = pneg %p166
      $region34: #{basic_block_forward.1} parent=11 // pred_check_branch
        %245 = sbr.rel (%p243) target = $region36
      $region35: #{basic_block_forward.1} parent=11 // pred_region
        _
      $region36: #{basic_block_forward.1} parent=11 // pred_fallthru
        _
      // Predicated region
      $region37: #{basic_block_forward.1} parent=11 // pred_check
        %p246 = pneg %p187
      $region38: #{basic_block_forward.1} parent=11 // pred_check_branch
        %248 = sbr.rel (%p246) target = $region40
      $region39: #{basic_block_forward.1} parent=11 // pred_region
        _
      $region40: #{basic_block_forward.1} parent=11 // pred_fallthru
        _
    $region12: #{basic_block_forward.1} parent=5 // pred_fallthru
      _
    %p249 = scmp.lt.s32.totalorder %s14, 2
    // Predicated region
    $region41: #{basic_block_forward.1} parent=5 // pred_check
      %p250 = pneg %p249
    $region42: #{basic_block_forward.1} parent=5 // pred_check_branch
      %252 = sbr.rel (%p250) target = $region44
    $region43: #{basic_block_forward.1} parent=5 // pred_region
      // Predicated region
      $region45: #{basic_block_forward.1} parent=43 // pred_check
        %p253 = pneg %p34
      $region46: #{basic_block_forward.1} parent=43 // pred_check_branch
        %255 = sbr.rel (%p253) target = $region48
      $region47: #{basic_block_forward.1} parent=43 // pred_region
        %p256 = scmp.lt.s32.totalorder %s14, 1
        %s257 = scalar_select %p256, %s14, 1
        %s258 = smul.addr %s257, 4
        %s259 = smul.addr %s258, 8
        %s260 = scalar_lea.vmem %s0, %s259
      $region48: #{basic_block_forward.1} parent=43 // pred_fallthru
        _
    $region44: #{basic_block_forward.1} parent=5 // pred_fallthru
      _
    %p261 = scmp.le.s32.totalorder 1, %s14
    %p262 = scmp.lt.s32.totalorder %s14, 3
    %p263 = pnand %p261, %p262
    %p264 = pneg %p263
    // Predicated region
    $region49: #{basic_block_forward.1} parent=5 // pred_check
      _
    $region50: #{basic_block_forward.1} parent=5 // pred_check_branch
      %266 = sbr.rel (%p263) target = $region52
    $region51: #{basic_block_forward.1} parent=5 // pred_region
      %s267 = ssub.s32 %s14, 1
      %p268 = scmp.lt.s32.totalorder %s19, 1
      %s269 = scalar_select %p268, %s19, 1
      %s270 = smul.addr %s269, 4
      %s271 = smul.addr %s270, 8
      %s272 = scalar_lea.vmem %s0, %s271
      %p273 = pneg %p40
      %p274 = pneg %p37
      %p275 = pneg %p61
      %p276 = pneg %p58
      %p277 = pneg %p82
      %p278 = pneg %p79
      %p279 = pneg %p103
      %p280 = pneg %p100
      %p281 = pneg %p124
      %p282 = pneg %p121
      %p283 = pneg %p145
      %p284 = pneg %p142
      %p285 = pneg %p166
      %p286 = pneg %p163
      %p287 = pneg %p187
      %p288 = pneg %p184
      %p289 = pneg %p213
      %p290 = pneg %p210
      %p291 = scmp.lt.s32.totalorder %s19, 1
      %s292 = scalar_select %p291, %s19, 1
      %s293 = smul.addr %s292, 4
      %s294 = smul.addr %s293, 8
      %s295 = scalar_lea.vmem %s8, %s294
      %p296 = scmp.lt.s32.totalorder %s19, 1
      %s297 = scalar_select %p296, %s19, 1
      %s298 = smul.addr %s297, 4
      %s299 = smul.addr %s298, 8
      %s300 = scalar_lea.vmem %s0, %s299
      %p301 = scmp.lt.s32.totalorder %s19, 1
      %s302 = scalar_select %p301, %s19, 1
      %s303 = smul.addr %s302, 4
      %s304 = smul.addr %s303, 8
      %s305 = scalar_lea.vmem %s8, %s304
      %v309 = vld [vmem:[%s300] sm:$0xff]
      %v310 = vld [vmem:[%s300 + $0x8] sm:$0xff]
      %v311 = vld [vmem:[%s300 + $0x10] sm:$0xff]
      %v312 = vld [vmem:[%s300 + $0x18] sm:$0xff]
      %v313 = vpack.c.bf16 %v310, %v309
      %v314 = vpack.c.bf16 %v312, %v311
      %v317 = vunpack.c.l.b16 %v313
      %v318 = vunpack.c.h.b16 %v313
      %v319 = vunpack.c.l.b16 %v314
      %v320 = vunpack.c.h.b16 %v314
      %v321 = vpack.c.b16 %v319, %v317
      %v322 = vpack.c.b16 %v320, %v318
      %323 = vrot.lane.b32.xlu0 %v321, 17
      %v324 = vpop.permute.xlu0 %323
      %325 = vrot.lane.b32.xlu0 %v322, 17
      %v326 = vpop.permute.xlu0 %325
      %vm327 = vcmask 138240
      %v328 = vsel %vm327, %v324, %v326
      %vm330 = vcmask 138240
      %v333 = vsel %vm330, 0, %v324
      %v336 = vsel %vm330, %v326, 0
      %v338 = vld [vmem:[%s1] sm:$0x3]
      %vm339 = vcmp.ne.f32.partialorder %v338, 0.0
      %v340 = vsel %vm339, 1, 0
      %v341 = vperm.slane %v340, 0
      %v342 = vperm.slane %v340, 1
      %vm343 = vcmp.eq.s32.totalorder %v341, 1
      %vm344 = vcmp.eq.s32.totalorder %v342, 1
      %vm345 = vmpackc.low %vm344, %vm343
      %v346 = vsel %vm345, 65537, 0
      %v347 = vperm.slane %v346, 0
      %v348 = vperm.slane %v346, 4
      %v349 = vunpack.c.l.b16 %v347
      %v350 = vunpack.c.h.b16 %v347
      %v351 = vunpack.c.l.b16 0
      %v352 = vunpack.c.h.b16 0
      %vm353 = vcmp.ne.s32.totalorder %v349, %v351
      %vm354 = vcmp.ne.s32.totalorder %v350, %v352
      %vm355 = vmpackc.low %vm354, %vm353
      %v356 = vunpack.c.l.b16 %v348
      %v357 = vunpack.c.h.b16 %v348
      %v358 = vunpack.c.l.b16 0
      %v359 = vunpack.c.h.b16 0
      %vm360 = vcmp.ne.s32.totalorder %v356, %v358
      %vm361 = vcmp.ne.s32.totalorder %v357, %v359
      %vm362 = vmpackc.low %vm361, %vm360
      %v363 = vsel %vm355, %v333, 0
      %v364 = vsel %vm362, %v328, 0
      %v365 = vld [vmem:[%s2] sm:$0xf]
      %v366 = vld [vmem:[%s2 + $0x4] sm:$0xf]
      %s367 = scalar_lea.vmem %s2, 8
      %v368 = vld [vmem:[%s367] sm:$0xf]
      %v369 = vld [vmem:[%s367 + $0x4] sm:$0xf]
      %v372 = vunpack.c.l.b16 %v368
      %v373 = vunpack.c.l.b16 %v369
      %v374 = vpack.c.b16 %v373, %v372
      %377 = vrot.lane.b32.xlu0 %v333, 127
      %v378 = vpop.permute.xlu0 %377
      %379 = vrot.lane.b32.xlu0 %v328, 127
      %v380 = vpop.permute.xlu0 %379
      %381 = vrot.lane.b32.xlu0 %v336, 127
      %v382 = vpop.permute.xlu0 %381
      %vm383 = vcmask 1039360
      %v384 = vsel %vm383, %v378, %v380
      %v385 = vsel %vm383, %v380, %v382
      %vm388 = vcmask 130048
      %v390 = vsel %vm388, %v374, 0
      %392 = vmatpush.bf16.msra.mxu0 0
      %393 = vmatpush.bf16.msra.mxu0 0
      %394 = vmatpush.bf16.msra.mxu0 0
      %395 = vmatpush.bf16.msra.mxu0 0
      %396 = vmatpush.bf16.msra.mxu0 0
      %397 = vmatpush.bf16.msra.mxu0 0
      %398 = vmatpush.bf16.msra.mxu0 0
      %399 = vmatpush.bf16.msra.mxu0 %v384
      %400 = vmatmul.bf16.gmra.mxu0 %v390
      %v401 = vpop.f32.mrf.mxu0
      %v402 = vadd.f32 0.0, %v401
      %v403 = vpop.f32.mrf.mxu0
      %v404 = vadd.f32 0.0, %v403
      %405 = vdwg.mxu0
      %406 = vmatpush.bf16.msra.mxu0 0
      %407 = vmatpush.bf16.msra.mxu0 0
      %408 = vmatpush.bf16.msra.mxu0 0
      %409 = vmatpush.bf16.msra.mxu0 0
      %410 = vmatpush.bf16.msra.mxu0 0
      %411 = vmatpush.bf16.msra.mxu0 0
      %412 = vmatpush.bf16.msra.mxu0 0
      %413 = vmatpush.bf16.msra.mxu0 %v385
      %414 = vmatmul.bf16.gmra.mxu0 %v390
      %v415 = vpop.f32.mrf.mxu0
      %v416 = vadd.f32 0.0, %v415
      %v417 = vpop.f32.mrf.mxu0
      %v418 = vadd.f32 0.0, %v417
      %419 = vdwg.mxu0
      %v422 = vunpack.c.l.b16 %v365
      %v423 = vunpack.c.l.b16 %v366
      %v424 = vpack.c.b16 %v423, %v422
      %v426 = vsel %vm388, %v424, 0
      %428 = vmatpush.bf16.msra.mxu0 0
      %429 = vmatpush.bf16.msra.mxu0 0
      %430 = vmatpush.bf16.msra.mxu0 0
      %431 = vmatpush.bf16.msra.mxu0 0
      %432 = vmatpush.bf16.msra.mxu0 0
      %433 = vmatpush.bf16.msra.mxu0 0
      %434 = vmatpush.bf16.msra.mxu0 0
      %435 = vmatpush.bf16.msra.mxu0 %v363
      %436 = vmatmul.bf16.gmra.mxu0 %v426
      %v437 = vpop.f32.mrf.mxu0
      %v438 = vadd.f32 %v402, %v437
      %v439 = vpop.f32.mrf.mxu0
      %v440 = vadd.f32 %v404, %v439
      %441 = vdwg.mxu0
      %442 = vmatpush.bf16.msra.mxu0 0
      %443 = vmatpush.bf16.msra.mxu0 0
      %444 = vmatpush.bf16.msra.mxu0 0
      %445 = vmatpush.bf16.msra.mxu0 0
      %446 = vmatpush.bf16.msra.mxu0 0
      %447 = vmatpush.bf16.msra.mxu0 0
      %448 = vmatpush.bf16.msra.mxu0 0
      %449 = vmatpush.bf16.msra.mxu0 %v364
      %450 = vmatmul.bf16.gmra.mxu0 %v426
      %v451 = vpop.f32.mrf.mxu0
      %v452 = vadd.f32 %v416, %v451
      %v453 = vpop.f32.mrf.mxu0
      %v454 = vadd.f32 %v418, %v453
      %455 = vdwg.mxu0
      %s456 = scalar_lea.vmem %s1, 2
      %v457 = vld [vmem:[%s456] sm:$0x3]
      %vm458 = vcmp.ne.f32.partialorder %v457, 0.0
      %v459 = vsel %vm458, 1, 0
      %v460 = vperm.slane %v459, 0
      %v461 = vperm.slane %v459, 1
      %vm462 = vcmp.eq.s32.totalorder %v460, 1
      %vm463 = vcmp.eq.s32.totalorder %v461, 1
      %vm464 = vmpackc.low %vm463, %vm462
      %v465 = vsel %vm464, 65537, 0
      %v466 = vperm.slane %v465, 0
      %v467 = vperm.slane %v465, 4
      %468 = vrot.lane.b32.xlu0 %v466, 2
      %v469 = vpop.permute.xlu0 %468
      %470 = vrot.lane.b32.xlu0 %v467, 2
      %v471 = vpop.permute.xlu0 %470
      %vm472 = vcmask 15360
      %v473 = vsel %vm472, %v469, %v471
      %v474 = vunpack.c.l.b16 %v469
      %v475 = vunpack.c.h.b16 %v469
      %v476 = vunpack.c.l.b16 0
      %v477 = vunpack.c.h.b16 0
      %vm478 = vcmp.ne.s32.totalorder %v474, %v476
      %vm479 = vcmp.ne.s32.totalorder %v475, %v477
      %vm480 = vmpackc.low %vm479, %vm478
      %v481 = vunpack.c.l.b16 %v473
      %v482 = vunpack.c.h.b16 %v473
      %v483 = vunpack.c.l.b16 0
      %v484 = vunpack.c.h.b16 0
      %vm485 = vcmp.ne.s32.totalorder %v481, %v483
      %vm486 = vcmp.ne.s32.totalorder %v482, %v484
      %vm487 = vmpackc.low %vm486, %vm485
      %v488 = vunpack.c.l.b16 %v471
      %v489 = vunpack.c.h.b16 %v471
      %v490 = vunpack.c.l.b16 0
      %v491 = vunpack.c.h.b16 0
      %vm492 = vcmp.ne.s32.totalorder %v488, %v490
      %vm493 = vcmp.ne.s32.totalorder %v489, %v491
      %vm494 = vmpackc.low %vm493, %vm492
      %v495 = vsel %vm480, %v333, 0
      %v496 = vsel %vm487, %v328, 0
      %v497 = vsel %vm494, %v336, 0
      %s498 = scalar_lea.vmem %s2, 16
      %v499 = vld [vmem:[%s498] sm:$0xf]
      %v500 = vld [vmem:[%s498 + $0x4] sm:$0xf]
      %v503 = vunpack.c.l.b16 %v499
      %v504 = vunpack.c.l.b16 %v500
      %v505 = vpack.c.b16 %v504, %v503
      %509 = vrot.lane.b32.xlu0 %v495, 126
      %v510 = vpop.permute.xlu0 %509
      %511 = vrot.lane.b32.xlu0 %v496, 126
      %v512 = vpop.permute.xlu0 %511
      %513 = vrot.lane.b32.xlu0 %v497, 126
      %v514 = vpop.permute.xlu0 %513
      %vm515 = vcmask 1031168
      %v516 = vsel %vm515, %v510, %v512
      %v517 = vsel %vm515, %v512, %v514
      %v521 = vsel %vm388, %v505, 0
      %523 = vmatpush.bf16.msra.mxu0 0
      %524 = vmatpush.bf16.msra.mxu0 0
      %525 = vmatpush.bf16.msra.mxu0 0
      %526 = vmatpush.bf16.msra.mxu0 0
      %527 = vmatpush.bf16.msra.mxu0 0
      %528 = vmatpush.bf16.msra.mxu0 0
      %529 = vmatpush.bf16.msra.mxu0 0
      %530 = vmatpush.bf16.msra.mxu0 %v516
      %531 = vmatmul.bf16.gmra.mxu0 %v521
      %v532 = vpop.f32.mrf.mxu0
      %v533 = vadd.f32 0.0, %v532
      %v534 = vpop.f32.mrf.mxu0
      %v535 = vadd.f32 0.0, %v534
      %536 = vdwg.mxu0
      %537 = vmatpush.bf16.msra.mxu0 0
      %538 = vmatpush.bf16.msra.mxu0 0
      %539 = vmatpush.bf16.msra.mxu0 0
      %540 = vmatpush.bf16.msra.mxu0 0
      %541 = vmatpush.bf16.msra.mxu0 0
      %542 = vmatpush.bf16.msra.mxu0 0
      %543 = vmatpush.bf16.msra.mxu0 0
      %544 = vmatpush.bf16.msra.mxu0 %v517
      %545 = vmatmul.bf16.gmra.mxu0 %v521
      %v546 = vpop.f32.mrf.mxu0
      %v547 = vadd.f32 0.0, %v546
      %v548 = vpop.f32.mrf.mxu0
      %v549 = vadd.f32 0.0, %v548
      %550 = vdwg.mxu0
      %v551 = vadd.f32 %v438, %v533
      %v552 = vadd.f32 %v452, %v547
      %v553 = vadd.f32 %v440, %v535
      %v554 = vadd.f32 %v454, %v549
      %555 = vrot.lane.b32.xlu0 %v347, 16
      %v556 = vpop.permute.xlu0 %555
      %557 = vrot.lane.b32.xlu0 %v348, 16
      %v558 = vpop.permute.xlu0 %557
      %vm559 = vcmask 130048
      %v560 = vsel %vm559, %v556, %v558
      %v561 = vunpack.c.l.b16 %v556
      %v562 = vunpack.c.h.b16 %v556
      %v563 = vunpack.c.l.b16 0
      %v564 = vunpack.c.h.b16 0
      %vm565 = vcmp.ne.s32.totalorder %v561, %v563
      %vm566 = vcmp.ne.s32.totalorder %v562, %v564
      %vm567 = vmpackc.low %vm566, %vm565
      %v568 = vunpack.c.l.b16 %v560
      %v569 = vunpack.c.h.b16 %v560
      %v570 = vunpack.c.l.b16 0
      %v571 = vunpack.c.h.b16 0
      %vm572 = vcmp.ne.s32.totalorder %v568, %v570
      %vm573 = vcmp.ne.s32.totalorder %v569, %v571
      %vm574 = vmpackc.low %vm573, %vm572
      %v575 = vunpack.c.l.b16 %v558
      %v576 = vunpack.c.h.b16 %v558
      %v577 = vunpack.c.l.b16 0
      %v578 = vunpack.c.h.b16 0
      %vm579 = vcmp.ne.s32.totalorder %v575, %v577
      %vm580 = vcmp.ne.s32.totalorder %v576, %v578
      %vm581 = vmpackc.low %vm580, %vm579
      %v582 = vsel %vm567, %v333, 0
      %v583 = vsel %vm574, %v328, 0
      %v584 = vsel %vm581, %v336, 0
      %s585 = scalar_lea.vmem %s2, 24
      %v586 = vld [vmem:[%s585] sm:$0xf]
      %v587 = vld [vmem:[%s585 + $0x4] sm:$0xf]
      %v590 = vunpack.c.l.b16 %v586
      %v591 = vunpack.c.l.b16 %v587
      %v592 = vpack.c.b16 %v591, %v590
      %596 = vrot.lane.b32.xlu0 %v582, 112
      %v597 = vpop.permute.xlu0 %596
      %598 = vrot.lane.b32.xlu0 %v583, 112
      %v599 = vpop.permute.xlu0 %598
      %600 = vrot.lane.b32.xlu0 %v584, 112
      %v601 = vpop.permute.xlu0 %600
      %vm602 = vcmask 916480
      %v603 = vsel %vm602, %v597, %v599
      %v604 = vsel %vm602, %v599, %v601
      %v608 = vsel %vm388, %v592, 0
      %610 = vmatpush.bf16.msra.mxu0 0
      %611 = vmatpush.bf16.msra.mxu0 0
      %612 = vmatpush.bf16.msra.mxu0 0
      %613 = vmatpush.bf16.msra.mxu0 0
      %614 = vmatpush.bf16.msra.mxu0 0
      %615 = vmatpush.bf16.msra.mxu0 0
      %616 = vmatpush.bf16.msra.mxu0 0
      %617 = vmatpush.bf16.msra.mxu0 %v603
      %618 = vmatmul.bf16.gmra.mxu0 %v608
      %v619 = vpop.f32.mrf.mxu0
      %v620 = vadd.f32 0.0, %v619
      %v621 = vpop.f32.mrf.mxu0
      %v622 = vadd.f32 0.0, %v621
      %623 = vdwg.mxu0
      %624 = vmatpush.bf16.msra.mxu0 0
      %625 = vmatpush.bf16.msra.mxu0 0
      %626 = vmatpush.bf16.msra.mxu0 0
      %627 = vmatpush.bf16.msra.mxu0 0
      %628 = vmatpush.bf16.msra.mxu0 0
      %629 = vmatpush.bf16.msra.mxu0 0
      %630 = vmatpush.bf16.msra.mxu0 0
      %631 = vmatpush.bf16.msra.mxu0 %v604
      %632 = vmatmul.bf16.gmra.mxu0 %v608
      %v633 = vpop.f32.mrf.mxu0
      %v634 = vadd.f32 0.0, %v633
      %v635 = vpop.f32.mrf.mxu0
      %v636 = vadd.f32 0.0, %v635
      %637 = vdwg.mxu0
      %v638 = vadd.f32 %v551, %v620
      %v639 = vadd.f32 %v552, %v634
      %v640 = vadd.f32 %v553, %v622
      %v641 = vadd.f32 %v554, %v636
      %s642 = scalar_lea.vmem %s2, 32
      %v643 = vld [vmem:[%s642] sm:$0xf]
      %v644 = vld [vmem:[%s642 + $0x4] sm:$0xf]
      %v647 = vunpack.c.l.b16 %v643
      %v648 = vunpack.c.l.b16 %v644
      %v649 = vpack.c.b16 %v648, %v647
      %650 = vrot.lane.b32.xlu0 %v333, 111
      %v651 = vpop.permute.xlu0 %650
      %652 = vrot.lane.b32.xlu0 %v328, 111
      %v653 = vpop.permute.xlu0 %652
      %654 = vrot.lane.b32.xlu0 %v336, 111
      %v655 = vpop.permute.xlu0 %654
      %vm656 = vcmask 908288
      %v657 = vsel %vm656, %v651, %v653
      %v658 = vsel %vm656, %v653, %v655
      %v662 = vsel %vm388, %v649, 0
      %664 = vmatpush.bf16.msra.mxu0 0
      %665 = vmatpush.bf16.msra.mxu0 0
      %666 = vmatpush.bf16.msra.mxu0 0
      %667 = vmatpush.bf16.msra.mxu0 0
      %668 = vmatpush.bf16.msra.mxu0 0
      %669 = vmatpush.bf16.msra.mxu0 0
      %670 = vmatpush.bf16.msra.mxu0 0
      %671 = vmatpush.bf16.msra.mxu0 %v657
      %672 = vmatmul.bf16.gmra.mxu0 %v662
      %v673 = vpop.f32.mrf.mxu0
      %v674 = vadd.f32 0.0, %v673
      %v675 = vpop.f32.mrf.mxu0
      %v676 = vadd.f32 0.0, %v675
      %677 = vdwg.mxu0
      %678 = vmatpush.bf16.msra.mxu0 0
      %679 = vmatpush.bf16.msra.mxu0 0
      %680 = vmatpush.bf16.msra.mxu0 0
      %681 = vmatpush.bf16.msra.mxu0 0
      %682 = vmatpush.bf16.msra.mxu0 0
      %683 = vmatpush.bf16.msra.mxu0 0
      %684 = vmatpush.bf16.msra.mxu0 0
      %685 = vmatpush.bf16.msra.mxu0 %v658
      %686 = vmatmul.bf16.gmra.mxu0 %v662
      %v687 = vpop.f32.mrf.mxu0
      %v688 = vadd.f32 0.0, %v687
      %v689 = vpop.f32.mrf.mxu0
      %v690 = vadd.f32 0.0, %v689
      %691 = vdwg.mxu0
      %v692 = vadd.f32 %v638, %v674
      %v693 = vadd.f32 %v639, %v688
      %v694 = vadd.f32 %v640, %v676
      %v695 = vadd.f32 %v641, %v690
      %696 = vrot.lane.b32.xlu0 %v466, 18
      %v697 = vpop.permute.xlu0 %696
      %698 = vrot.lane.b32.xlu0 %v467, 18
      %v699 = vpop.permute.xlu0 %698
      %vm700 = vcmask 146432
      %v701 = vsel %vm700, %v697, %v699
      %v702 = vunpack.c.l.b16 %v697
      %v703 = vunpack.c.h.b16 %v697
      %v704 = vunpack.c.l.b16 0
      %v705 = vunpack.c.h.b16 0
      %vm706 = vcmp.ne.s32.totalorder %v702, %v704
      %vm707 = vcmp.ne.s32.totalorder %v703, %v705
      %vm708 = vmpackc.low %vm707, %vm706
      %v709 = vunpack.c.l.b16 %v701
      %v710 = vunpack.c.h.b16 %v701
      %v711 = vunpack.c.l.b16 0
      %v712 = vunpack.c.h.b16 0
      %vm713 = vcmp.ne.s32.totalorder %v709, %v711
      %vm714 = vcmp.ne.s32.totalorder %v710, %v712
      %vm715 = vmpackc.low %vm714, %vm713
      %v716 = vunpack.c.l.b16 %v699
      %v717 = vunpack.c.h.b16 %v699
      %v718 = vunpack.c.l.b16 0
      %v719 = vunpack.c.h.b16 0
      %vm720 = vcmp.ne.s32.totalorder %v716, %v718
      %vm721 = vcmp.ne.s32.totalorder %v717, %v719
      %vm722 = vmpackc.low %vm721, %vm720
      %v723 = vsel %vm708, %v333, 0
      %v724 = vsel %vm715, %v328, 0
      %v725 = vsel %vm722, %v336, 0
      %s726 = scalar_lea.vmem %s2, 40
      %v727 = vld [vmem:[%s726] sm:$0xf]
      %v728 = vld [vmem:[%s726 + $0x4] sm:$0xf]
      %v731 = vunpack.c.l.b16 %v727
      %v732 = vunpack.c.l.b16 %v728
      %v733 = vpack.c.b16 %v732, %v731
      %737 = vrot.lane.b32.xlu0 %v723, 110
      %v738 = vpop.permute.xlu0 %737
      %739 = vrot.lane.b32.xlu0 %v724, 110
      %v740 = vpop.permute.xlu0 %739
      %741 = vrot.lane.b32.xlu0 %v725, 110
      %v742 = vpop.permute.xlu0 %741
      %vm743 = vcmask 900096
      %v744 = vsel %vm743, %v738, %v740
      %v745 = vsel %vm743, %v740, %v742
      %v749 = vsel %vm388, %v733, 0
      %751 = vmatpush.bf16.msra.mxu0 0
      %752 = vmatpush.bf16.msra.mxu0 0
      %753 = vmatpush.bf16.msra.mxu0 0
      %754 = vmatpush.bf16.msra.mxu0 0
      %755 = vmatpush.bf16.msra.mxu0 0
      %756 = vmatpush.bf16.msra.mxu0 0
      %757 = vmatpush.bf16.msra.mxu0 0
      %758 = vmatpush.bf16.msra.mxu0 %v744
      %759 = vmatmul.bf16.gmra.mxu0 %v749
      %v760 = vpop.f32.mrf.mxu0
      %v761 = vadd.f32 0.0, %v760
      %v762 = vpop.f32.mrf.mxu0
      %v763 = vadd.f32 0.0, %v762
      %764 = vdwg.mxu0
      %765 = vmatpush.bf16.msra.mxu0 0
      %766 = vmatpush.bf16.msra.mxu0 0
      %767 = vmatpush.bf16.msra.mxu0 0
      %768 = vmatpush.bf16.msra.mxu0 0
      %769 = vmatpush.bf16.msra.mxu0 0
      %770 = vmatpush.bf16.msra.mxu0 0
      %771 = vmatpush.bf16.msra.mxu0 0
      %772 = vmatpush.bf16.msra.mxu0 %v745
      %773 = vmatmul.bf16.gmra.mxu0 %v749
      %v774 = vpop.f32.mrf.mxu0
      %v775 = vadd.f32 0.0, %v774
      %v776 = vpop.f32.mrf.mxu0
      %v777 = vadd.f32 0.0, %v776
      %778 = vdwg.mxu0
      %v779 = vadd.f32 %v692, %v761
      %v780 = vadd.f32 %v693, %v775
      %v781 = vadd.f32 %v694, %v763
      %v782 = vadd.f32 %v695, %v777
      %783 = vrot.lane.b32.xlu0 %v347, 32
      %v784 = vpop.permute.xlu0 %783
      %785 = vrot.lane.b32.xlu0 %v348, 32
      %v786 = vpop.permute.xlu0 %785
      %vm787 = vcmask 261120
      %v788 = vsel %vm787, %v784, %v786
      %v789 = vunpack.c.l.b16 %v784
      %v790 = vunpack.c.h.b16 %v784
      %v791 = vunpack.c.l.b16 0
      %v792 = vunpack.c.h.b16 0
      %vm793 = vcmp.ne.s32.totalorder %v789, %v791
      %vm794 = vcmp.ne.s32.totalorder %v790, %v792
      %vm795 = vmpackc.low %vm794, %vm793
      %v796 = vunpack.c.l.b16 %v788
      %v797 = vunpack.c.h.b16 %v788
      %v798 = vunpack.c.l.b16 0
      %v799 = vunpack.c.h.b16 0
      %vm800 = vcmp.ne.s32.totalorder %v796, %v798
      %vm801 = vcmp.ne.s32.totalorder %v797, %v799
      %vm802 = vmpackc.low %vm801, %vm800
      %v803 = vunpack.c.l.b16 %v786
      %v804 = vunpack.c.h.b16 %v786
      %v805 = vunpack.c.l.b16 0
      %v806 = vunpack.c.h.b16 0
      %vm807 = vcmp.ne.s32.totalorder %v803, %v805
      %vm808 = vcmp.ne.s32.totalorder %v804, %v806
      %vm809 = vmpackc.low %vm808, %vm807
      %v810 = vsel %vm795, %v333, 0
      %v811 = vsel %vm802, %v328, 0
      %v812 = vsel %vm809, %v336, 0
      %s813 = scalar_lea.vmem %s2, 48
      %v814 = vld [vmem:[%s813] sm:$0xf]
      %v815 = vld [vmem:[%s813 + $0x4] sm:$0xf]
      %v818 = vunpack.c.l.b16 %v814
      %v819 = vunpack.c.l.b16 %v815
      %v820 = vpack.c.b16 %v819, %v818
      %824 = vrot.lane.b32.xlu0 %v810, 96
      %v825 = vpop.permute.xlu0 %824
      %826 = vrot.lane.b32.xlu0 %v811, 96
      %v827 = vpop.permute.xlu0 %826
      %828 = vrot.lane.b32.xlu0 %v812, 96
      %v829 = vpop.permute.xlu0 %828
      %vm830 = vcmask 785408
      %v831 = vsel %vm830, %v825, %v827
      %v832 = vsel %vm830, %v827, %v829
      %v836 = vsel %vm388, %v820, 0
      %838 = vmatpush.bf16.msra.mxu0 0
      %839 = vmatpush.bf16.msra.mxu0 0
      %840 = vmatpush.bf16.msra.mxu0 0
      %841 = vmatpush.bf16.msra.mxu0 0
      %842 = vmatpush.bf16.msra.mxu0 0
      %843 = vmatpush.bf16.msra.mxu0 0
      %844 = vmatpush.bf16.msra.mxu0 0
      %845 = vmatpush.bf16.msra.mxu0 %v831
      %846 = vmatmul.bf16.gmra.mxu0 %v836
      %v847 = vpop.f32.mrf.mxu0
      %v848 = vadd.f32 0.0, %v847
      %v849 = vpop.f32.mrf.mxu0
      %v850 = vadd.f32 0.0, %v849
      %851 = vdwg.mxu0
      %852 = vmatpush.bf16.msra.mxu0 0
      %853 = vmatpush.bf16.msra.mxu0 0
      %854 = vmatpush.bf16.msra.mxu0 0
      %855 = vmatpush.bf16.msra.mxu0 0
      %856 = vmatpush.bf16.msra.mxu0 0
      %857 = vmatpush.bf16.msra.mxu0 0
      %858 = vmatpush.bf16.msra.mxu0 0
      %859 = vmatpush.bf16.msra.mxu0 %v832
      %860 = vmatmul.bf16.gmra.mxu0 %v836
      %v861 = vpop.f32.mrf.mxu0
      %v862 = vadd.f32 0.0, %v861
      %v863 = vpop.f32.mrf.mxu0
      %v864 = vadd.f32 0.0, %v863
      %865 = vdwg.mxu0
      %v866 = vadd.f32 %v779, %v848
      %v867 = vadd.f32 %v780, %v862
      %v868 = vadd.f32 %v781, %v850
      %v869 = vadd.f32 %v782, %v864
      %s870 = scalar_lea.vmem %s2, 56
      %v871 = vld [vmem:[%s870] sm:$0xf]
      %v872 = vld [vmem:[%s870 + $0x4] sm:$0xf]
      %v875 = vunpack.c.l.b16 %v871
      %v876 = vunpack.c.l.b16 %v872
      %v877 = vpack.c.b16 %v876, %v875
      %878 = vrot.lane.b32.xlu0 %v333, 95
      %v879 = vpop.permute.xlu0 %878
      %880 = vrot.lane.b32.xlu0 %v328, 95
      %v881 = vpop.permute.xlu0 %880
      %882 = vrot.lane.b32.xlu0 %v336, 95
      %v883 = vpop.permute.xlu0 %882
      %vm884 = vcmask 777216
      %v885 = vsel %vm884, %v879, %v881
      %v886 = vsel %vm884, %v881, %v883
      %v890 = vsel %vm388, %v877, 0
      %892 = vmatpush.bf16.msra.mxu0 0
      %893 = vmatpush.bf16.msra.mxu0 0
      %894 = vmatpush.bf16.msra.mxu0 0
      %895 = vmatpush.bf16.msra.mxu0 0
      %896 = vmatpush.bf16.msra.mxu0 0
      %897 = vmatpush.bf16.msra.mxu0 0
      %898 = vmatpush.bf16.msra.mxu0 0
      %899 = vmatpush.bf16.msra.mxu0 %v885
      %900 = vmatmul.bf16.gmra.mxu0 %v890
      %v901 = vpop.f32.mrf.mxu0
      %v902 = vadd.f32 0.0, %v901
      %v903 = vpop.f32.mrf.mxu0
      %v904 = vadd.f32 0.0, %v903
      %905 = vdwg.mxu0
      %906 = vmatpush.bf16.msra.mxu0 0
      %907 = vmatpush.bf16.msra.mxu0 0
      %908 = vmatpush.bf16.msra.mxu0 0
      %909 = vmatpush.bf16.msra.mxu0 0
      %910 = vmatpush.bf16.msra.mxu0 0
      %911 = vmatpush.bf16.msra.mxu0 0
      %912 = vmatpush.bf16.msra.mxu0 0
      %913 = vmatpush.bf16.msra.mxu0 %v886
      %914 = vmatmul.bf16.gmra.mxu0 %v890
      %v915 = vpop.f32.mrf.mxu0
      %v916 = vadd.f32 0.0, %v915
      %v917 = vpop.f32.mrf.mxu0
      %v918 = vadd.f32 0.0, %v917
      %919 = vdwg.mxu0
      %v920 = vadd.f32 %v866, %v902
      %v921 = vadd.f32 %v867, %v916
      %v922 = vadd.f32 %v868, %v904
      %v923 = vadd.f32 %v869, %v918
      %924 = vrot.lane.b32.xlu0 %v466, 34
      %v925 = vpop.permute.xlu0 %924
      %926 = vrot.lane.b32.xlu0 %v467, 34
      %v927 = vpop.permute.xlu0 %926
      %vm928 = vcmask 277504
      %v929 = vsel %vm928, %v925, %v927
      %v930 = vunpack.c.l.b16 %v925
      %v931 = vunpack.c.h.b16 %v925
      %v932 = vunpack.c.l.b16 0
      %v933 = vunpack.c.h.b16 0
      %vm934 = vcmp.ne.s32.totalorder %v930, %v932
      %vm935 = vcmp.ne.s32.totalorder %v931, %v933
      %vm936 = vmpackc.low %vm935, %vm934
      %v937 = vunpack.c.l.b16 %v929
      %v938 = vunpack.c.h.b16 %v929
      %v939 = vunpack.c.l.b16 0
      %v940 = vunpack.c.h.b16 0
      %vm941 = vcmp.ne.s32.totalorder %v937, %v939
      %vm942 = vcmp.ne.s32.totalorder %v938, %v940
      %vm943 = vmpackc.low %vm942, %vm941
      %v944 = vunpack.c.l.b16 %v927
      %v945 = vunpack.c.h.b16 %v927
      %v946 = vunpack.c.l.b16 0
      %v947 = vunpack.c.h.b16 0
      %vm948 = vcmp.ne.s32.totalorder %v944, %v946
      %vm949 = vcmp.ne.s32.totalorder %v945, %v947
      %vm950 = vmpackc.low %vm949, %vm948
      %v951 = vsel %vm936, %v333, 0
      %v952 = vsel %vm943, %v328, 0
      %v953 = vsel %vm950, %v336, 0
      %s954 = scalar_lea.vmem %s2, 64
      %v955 = vld [vmem:[%s954] sm:$0xf]
      %v956 = vld [vmem:[%s954 + $0x4] sm:$0xf]
      %v959 = vunpack.c.l.b16 %v955
      %v960 = vunpack.c.l.b16 %v956
      %v961 = vpack.c.b16 %v960, %v959
      %965 = vrot.lane.b32.xlu0 %v951, 94
      %v966 = vpop.permute.xlu0 %965
      %967 = vrot.lane.b32.xlu0 %v952, 94
      %v968 = vpop.permute.xlu0 %967
      %969 = vrot.lane.b32.xlu0 %v953, 94
      %v970 = vpop.permute.xlu0 %969
      %vm971 = vcmask 769024
      %v972 = vsel %vm971, %v966, %v968
      %v973 = vsel %vm971, %v968, %v970
      %v977 = vsel %vm388, %v961, 0
      %979 = vmatpush.bf16.msra.mxu0 0
      %980 = vmatpush.bf16.msra.mxu0 0
      %981 = vmatpush.bf16.msra.mxu0 0
      %982 = vmatpush.bf16.msra.mxu0 0
      %983 = vmatpush.bf16.msra.mxu0 0
      %984 = vmatpush.bf16.msra.mxu0 0
      %985 = vmatpush.bf16.msra.mxu0 0
      %986 = vmatpush.bf16.msra.mxu0 %v972
      %987 = vmatmul.bf16.gmra.mxu0 %v977
      %v988 = vpop.f32.mrf.mxu0
      %v989 = vadd.f32 0.0, %v988
      %v990 = vpop.f32.mrf.mxu0
      %v991 = vadd.f32 0.0, %v990
      %992 = vdwg.mxu0
      %993 = vmatpush.bf16.msra.mxu0 0
      %994 = vmatpush.bf16.msra.mxu0 0
      %995 = vmatpush.bf16.msra.mxu0 0
      %996 = vmatpush.bf16.msra.mxu0 0
      %997 = vmatpush.bf16.msra.mxu0 0
      %998 = vmatpush.bf16.msra.mxu0 0
      %999 = vmatpush.bf16.msra.mxu0 0
      %1000 = vmatpush.bf16.msra.mxu0 %v973
      %1001 = vmatmul.bf16.gmra.mxu0 %v977
      %v1002 = vpop.f32.mrf.mxu0
      %v1003 = vadd.f32 0.0, %v1002
      %v1004 = vpop.f32.mrf.mxu0
      %v1005 = vadd.f32 0.0, %v1004
      %1006 = vdwg.mxu0
      %v1007 = vadd.f32 %v920, %v989
      %v1008 = vadd.f32 %v921, %v1003
      %v1009 = vadd.f32 %v922, %v991
      %v1010 = vadd.f32 %v923, %v1005
      %v1011 = vld [vmem:[%s4] sm:$0xff]
      %v1012 = vld [vmem:[%s4 + $0x8] sm:$0xff]
      %1014 = vset.pattern.permute.xlu0 0
      %1015 = vperm.xlu0 %1014, %v1011
      %v1016 = vpop.permute.xlu0 %1015
      %1019 = vset.pattern.permute.xlu0 0
      %1020 = vperm.xlu0 %1019, %v1012
      %v1021 = vpop.permute.xlu0 %1020
      %v1023 = vmul.f32 %v1007, %v1016
      %v1024 = vmul.f32 %v1008, %v1016
      %v1025 = vmul.f32 %v1009, %v1021
      %v1026 = vmul.f32 %v1010, %v1021
      %v1027 = vld [vmem:[%s5] sm:$0xff]
      %v1028 = vld [vmem:[%s5 + $0x8] sm:$0xff]
      %1030 = vset.pattern.permute.xlu0 0
      %1031 = vperm.xlu0 %1030, %v1027
      %v1032 = vpop.permute.xlu0 %1031
      %1035 = vset.pattern.permute.xlu0 0
      %1036 = vperm.xlu0 %1035, %v1028
      %v1037 = vpop.permute.xlu0 %1036
      %v1039 = vadd.f32 %v1023, %v1032
      %v1040 = vadd.f32 %v1024, %v1032
      %v1041 = vadd.f32 %v1025, %v1037
      %v1042 = vadd.f32 %v1026, %v1037
      %v1043 = vmax.f32 %v1039, 0.0
      %v1044 = vmax.f32 %v1040, 0.0
      %v1045 = vmax.f32 %v1041, 0.0
      %v1046 = vmax.f32 %v1042, 0.0
      %v1047 = vpack.c.bf16 %v1044, %v1043
      %v1048 = vpack.c.bf16 %v1046, %v1045
      %1049 = vst [vmem:[#allocation2] sm:$0xff] %v1047
      %1050 = vst [vmem:[#allocation2 + $0x8] sm:$0xff] %v1048
      %v1051 = vld [vmem:[#allocation2] sm:$0xff]
      %v1052 = vld [vmem:[#allocation2 + $0x8] sm:$0xff]
      %v1055 = vunpack.c.l.b16 %v1051
      %v1056 = vunpack.c.h.b16 %v1051
      %v1057 = vunpack.c.l.b16 %v1052
      %v1058 = vunpack.c.h.b16 %v1052
      %v1059 = vpack.c.b16 %v1057, %v1055
      %v1060 = vpack.c.b16 %v1058, %v1056
      %1061 = vrot.lane.b32.xlu0 %v1059, 17
      %v1062 = vpop.permute.xlu0 %1061
      %1063 = vrot.lane.b32.xlu0 %v1060, 17
      %v1064 = vpop.permute.xlu0 %1063
      %v1065 = vsel %vm327, %v1062, %v1064
      %v1068 = vsel %vm330, 0, %v1062
      %v1071 = vsel %vm330, %v1064, 0
      %v1073 = vld [vmem:[%s1] sm:$0x3]
      %vm1074 = vcmp.ne.f32.partialorder %v1073, 0.0
      %v1075 = vsel %vm1074, 1, 0
      %v1076 = vperm.slane %v1075, 0
      %v1077 = vperm.slane %v1075, 1
      %vm1078 = vcmp.eq.s32.totalorder %v1076, 1
      %vm1079 = vcmp.eq.s32.totalorder %v1077, 1
      %vm1080 = vmpackc.low %vm1079, %vm1078
      %v1081 = vsel %vm1080, 65537, 0
      %v1082 = vperm.slane %v1081, 0
      %v1083 = vperm.slane %v1081, 4
      %v1084 = vunpack.c.l.b16 %v1082
      %v1085 = vunpack.c.h.b16 %v1082
      %v1086 = vunpack.c.l.b16 0
      %v1087 = vunpack.c.h.b16 0
      %vm1088 = vcmp.ne.s32.totalorder %v1084, %v1086
      %vm1089 = vcmp.ne.s32.totalorder %v1085, %v1087
      %vm1090 = vmpackc.low %vm1089, %vm1088
      %v1091 = vunpack.c.l.b16 %v1083
      %v1092 = vunpack.c.h.b16 %v1083
      %v1093 = vunpack.c.l.b16 0
      %v1094 = vunpack.c.h.b16 0
      %vm1095 = vcmp.ne.s32.totalorder %v1091, %v1093
      %vm1096 = vcmp.ne.s32.totalorder %v1092, %v1094
      %vm1097 = vmpackc.low %vm1096, %vm1095
      %v1098 = vsel %vm1090, %v1068, 0
      %v1099 = vsel %vm1097, %v1065, 0
      %v1100 = vld [vmem:[%s3] sm:$0xf]
      %v1101 = vld [vmem:[%s3 + $0x4] sm:$0xf]
      %s1102 = scalar_lea.vmem %s3, 8
      %v1103 = vld [vmem:[%s1102] sm:$0xf]
      %v1104 = vld [vmem:[%s1102 + $0x4] sm:$0xf]
      %v1107 = vunpack.c.l.b16 %v1103
      %v1108 = vunpack.c.l.b16 %v1104
      %v1109 = vpack.c.b16 %v1108, %v1107
      %1112 = vrot.lane.b32.xlu0 %v1068, 127
      %v1113 = vpop.permute.xlu0 %1112
      %1114 = vrot.lane.b32.xlu0 %v1065, 127
      %v1115 = vpop.permute.xlu0 %1114
      %1116 = vrot.lane.b32.xlu0 %v1071, 127
      %v1117 = vpop.permute.xlu0 %1116
      %v1118 = vsel %vm383, %v1113, %v1115
      %v1119 = vsel %vm383, %v1115, %v1117
      %v1123 = vsel %vm388, %v1109, 0
      %1125 = vmatpush.bf16.msra.mxu0 0
      %1126 = vmatpush.bf16.msra.mxu0 0
      %1127 = vmatpush.bf16.msra.mxu0 0
      %1128 = vmatpush.bf16.msra.mxu0 0
      %1129 = vmatpush.bf16.msra.mxu0 0
      %1130 = vmatpush.bf16.msra.mxu0 0
      %1131 = vmatpush.bf16.msra.mxu0 0
      %1132 = vmatpush.bf16.msra.mxu0 %v1118
      %1133 = vmatmul.bf16.gmra.mxu0 %v1123
      %v1134 = vpop.f32.mrf.mxu0
      %v1135 = vadd.f32 0.0, %v1134
      %v1136 = vpop.f32.mrf.mxu0
      %v1137 = vadd.f32 0.0, %v1136
      %1138 = vdwg.mxu0
      %1139 = vmatpush.bf16.msra.mxu0 0
      %1140 = vmatpush.bf16.msra.mxu0 0
      %1141 = vmatpush.bf16.msra.mxu0 0
      %1142 = vmatpush.bf16.msra.mxu0 0
      %1143 = vmatpush.bf16.msra.mxu0 0
      %1144 = vmatpush.bf16.msra.mxu0 0
      %1145 = vmatpush.bf16.msra.mxu0 0
      %1146 = vmatpush.bf16.msra.mxu0 %v1119
      %1147 = vmatmul.bf16.gmra.mxu0 %v1123
      %v1148 = vpop.f32.mrf.mxu0
      %v1149 = vadd.f32 0.0, %v1148
      %v1150 = vpop.f32.mrf.mxu0
      %v1151 = vadd.f32 0.0, %v1150
      %1152 = vdwg.mxu0
      %v1155 = vunpack.c.l.b16 %v1100
      %v1156 = vunpack.c.l.b16 %v1101
      %v1157 = vpack.c.b16 %v1156, %v1155
      %v1159 = vsel %vm388, %v1157, 0
      %1161 = vmatpush.bf16.msra.mxu0 0
      %1162 = vmatpush.bf16.msra.mxu0 0
      %1163 = vmatpush.bf16.msra.mxu0 0
      %1164 = vmatpush.bf16.msra.mxu0 0
      %1165 = vmatpush.bf16.msra.mxu0 0
      %1166 = vmatpush.bf16.msra.mxu0 0
      %1167 = vmatpush.bf16.msra.mxu0 0
      %1168 = vmatpush.bf16.msra.mxu0 %v1098
      %1169 = vmatmul.bf16.gmra.mxu0 %v1159
      %v1170 = vpop.f32.mrf.mxu0
      %v1171 = vadd.f32 %v1135, %v1170
      %v1172 = vpop.f32.mrf.mxu0
      %v1173 = vadd.f32 %v1137, %v1172
      %1174 = vdwg.mxu0
      %1175 = vmatpush.bf16.msra.mxu0 0
      %1176 = vmatpush.bf16.msra.mxu0 0
      %1177 = vmatpush.bf16.msra.mxu0 0
      %1178 = vmatpush.bf16.msra.mxu0 0
      %1179 = vmatpush.bf16.msra.mxu0 0
      %1180 = vmatpush.bf16.msra.mxu0 0
      %1181 = vmatpush.bf16.msra.mxu0 0
      %1182 = vmatpush.bf16.msra.mxu0 %v1099
      %1183 = vmatmul.bf16.gmra.mxu0 %v1159
      %v1184 = vpop.f32.mrf.mxu0
      %v1185 = vadd.f32 %v1149, %v1184
      %v1186 = vpop.f32.mrf.mxu0
      %v1187 = vadd.f32 %v1151, %v1186
      %1188 = vdwg.mxu0
      %v1189 = vld [vmem:[%s456] sm:$0x3]
      %vm1190 = vcmp.ne.f32.partialorder %v1189, 0.0
      %v1191 = vsel %vm1190, 1, 0
      %v1192 = vperm.slane %v1191, 0
      %v1193 = vperm.slane %v1191, 1
      %vm1194 = vcmp.eq.s32.totalorder %v1192, 1
      %vm1195 = vcmp.eq.s32.totalorder %v1193, 1
      %vm1196 = vmpackc.low %vm1195, %vm1194
      %v1197 = vsel %vm1196, 65537, 0
      %v1198 = vperm.slane %v1197, 0
      %v1199 = vperm.slane %v1197, 4
      %1200 = vrot.lane.b32.xlu0 %v1198, 2
      %v1201 = vpop.permute.xlu0 %1200
      %1202 = vrot.lane.b32.xlu0 %v1199, 2
      %v1203 = vpop.permute.xlu0 %1202
      %v1204 = vsel %vm472, %v1201, %v1203
      %v1205 = vunpack.c.l.b16 %v1201
      %v1206 = vunpack.c.h.b16 %v1201
      %v1207 = vunpack.c.l.b16 0
      %v1208 = vunpack.c.h.b16 0
      %vm1209 = vcmp.ne.s32.totalorder %v1205, %v1207
      %vm1210 = vcmp.ne.s32.totalorder %v1206, %v1208
      %vm1211 = vmpackc.low %vm1210, %vm1209
      %v1212 = vunpack.c.l.b16 %v1204
      %v1213 = vunpack.c.h.b16 %v1204
      %v1214 = vunpack.c.l.b16 0
      %v1215 = vunpack.c.h.b16 0
      %vm1216 = vcmp.ne.s32.totalorder %v1212, %v1214
      %vm1217 = vcmp.ne.s32.totalorder %v1213, %v1215
      %vm1218 = vmpackc.low %vm1217, %vm1216
      %v1219 = vunpack.c.l.b16 %v1203
      %v1220 = vunpack.c.h.b16 %v1203
      %v1221 = vunpack.c.l.b16 0
      %v1222 = vunpack.c.h.b16 0
      %vm1223 = vcmp.ne.s32.totalorder %v1219, %v1221
      %vm1224 = vcmp.ne.s32.totalorder %v1220, %v1222
      %vm1225 = vmpackc.low %vm1224, %vm1223
      %v1226 = vsel %vm1211, %v1068, 0
      %v1227 = vsel %vm1218, %v1065, 0
      %v1228 = vsel %vm1225, %v1071, 0
      %s1229 = scalar_lea.vmem %s3, 16
      %v1230 = vld [vmem:[%s1229] sm:$0xf]
      %v1231 = vld [vmem:[%s1229 + $0x4] sm:$0xf]
      %v1234 = vunpack.c.l.b16 %v1230
      %v1235 = vunpack.c.l.b16 %v1231
      %v1236 = vpack.c.b16 %v1235, %v1234
      %1240 = vrot.lane.b32.xlu0 %v1226, 126
      %v1241 = vpop.permute.xlu0 %1240
      %1242 = vrot.lane.b32.xlu0 %v1227, 126
      %v1243 = vpop.permute.xlu0 %1242
      %1244 = vrot.lane.b32.xlu0 %v1228, 126
      %v1245 = vpop.permute.xlu0 %1244
      %v1246 = vsel %vm515, %v1241, %v1243
      %v1247 = vsel %vm515, %v1243, %v1245
      %v1251 = vsel %vm388, %v1236, 0
      %1253 = vmatpush.bf16.msra.mxu0 0
      %1254 = vmatpush.bf16.msra.mxu0 0
      %1255 = vmatpush.bf16.msra.mxu0 0
      %1256 = vmatpush.bf16.msra.mxu0 0
      %1257 = vmatpush.bf16.msra.mxu0 0
      %1258 = vmatpush.bf16.msra.mxu0 0
      %1259 = vmatpush.bf16.msra.mxu0 0
      %1260 = vmatpush.bf16.msra.mxu0 %v1246
      %1261 = vmatmul.bf16.gmra.mxu0 %v1251
      %v1262 = vpop.f32.mrf.mxu0
      %v1263 = vadd.f32 0.0, %v1262
      %v1264 = vpop.f32.mrf.mxu0
      %v1265 = vadd.f32 0.0, %v1264
      %1266 = vdwg.mxu0
      %1267 = vmatpush.bf16.msra.mxu0 0
      %1268 = vmatpush.bf16.msra.mxu0 0
      %1269 = vmatpush.bf16.msra.mxu0 0
      %1270 = vmatpush.bf16.msra.mxu0 0
      %1271 = vmatpush.bf16.msra.mxu0 0
      %1272 = vmatpush.bf16.msra.mxu0 0
      %1273 = vmatpush.bf16.msra.mxu0 0
      %1274 = vmatpush.bf16.msra.mxu0 %v1247
      %1275 = vmatmul.bf16.gmra.mxu0 %v1251
      %v1276 = vpop.f32.mrf.mxu0
      %v1277 = vadd.f32 0.0, %v1276
      %v1278 = vpop.f32.mrf.mxu0
      %v1279 = vadd.f32 0.0, %v1278
      %1280 = vdwg.mxu0
      %v1281 = vadd.f32 %v1171, %v1263
      %v1282 = vadd.f32 %v1185, %v1277
      %v1283 = vadd.f32 %v1173, %v1265
      %v1284 = vadd.f32 %v1187, %v1279
      %1285 = vrot.lane.b32.xlu0 %v1082, 16
      %v1286 = vpop.permute.xlu0 %1285
      %1287 = vrot.lane.b32.xlu0 %v1083, 16
      %v1288 = vpop.permute.xlu0 %1287
      %v1289 = vsel %vm559, %v1286, %v1288
      %v1290 = vunpack.c.l.b16 %v1286
      %v1291 = vunpack.c.h.b16 %v1286
      %v1292 = vunpack.c.l.b16 0
      %v1293 = vunpack.c.h.b16 0
      %vm1294 = vcmp.ne.s32.totalorder %v1290, %v1292
      %vm1295 = vcmp.ne.s32.totalorder %v1291, %v1293
      %vm1296 = vmpackc.low %vm1295, %vm1294
      %v1297 = vunpack.c.l.b16 %v1289
      %v1298 = vunpack.c.h.b16 %v1289
      %v1299 = vunpack.c.l.b16 0
      %v1300 = vunpack.c.h.b16 0
      %vm1301 = vcmp.ne.s32.totalorder %v1297, %v1299
      %vm1302 = vcmp.ne.s32.totalorder %v1298, %v1300
      %vm1303 = vmpackc.low %vm1302, %vm1301
      %v1304 = vunpack.c.l.b16 %v1288
      %v1305 = vunpack.c.h.b16 %v1288
      %v1306 = vunpack.c.l.b16 0
      %v1307 = vunpack.c.h.b16 0
      %vm1308 = vcmp.ne.s32.totalorder %v1304, %v1306
      %vm1309 = vcmp.ne.s32.totalorder %v1305, %v1307
      %vm1310 = vmpackc.low %vm1309, %vm1308
      %v1311 = vsel %vm1296, %v1068, 0
      %v1312 = vsel %vm1303, %v1065, 0
      %v1313 = vsel %vm1310, %v1071, 0
      %s1314 = scalar_lea.vmem %s3, 24
      %v1315 = vld [vmem:[%s1314] sm:$0xf]
      %v1316 = vld [vmem:[%s1314 + $0x4] sm:$0xf]
      %v1319 = vunpack.c.l.b16 %v1315
      %v1320 = vunpack.c.l.b16 %v1316
      %v1321 = vpack.c.b16 %v1320, %v1319
      %1325 = vrot.lane.b32.xlu0 %v1311, 112
      %v1326 = vpop.permute.xlu0 %1325
      %1327 = vrot.lane.b32.xlu0 %v1312, 112
      %v1328 = vpop.permute.xlu0 %1327
      %1329 = vrot.lane.b32.xlu0 %v1313, 112
      %v1330 = vpop.permute.xlu0 %1329
      %v1331 = vsel %vm602, %v1326, %v1328
      %v1332 = vsel %vm602, %v1328, %v1330
      %v1336 = vsel %vm388, %v1321, 0
      %1338 = vmatpush.bf16.msra.mxu0 0
      %1339 = vmatpush.bf16.msra.mxu0 0
      %1340 = vmatpush.bf16.msra.mxu0 0
      %1341 = vmatpush.bf16.msra.mxu0 0
      %1342 = vmatpush.bf16.msra.mxu0 0
      %1343 = vmatpush.bf16.msra.mxu0 0
      %1344 = vmatpush.bf16.msra.mxu0 0
      %1345 = vmatpush.bf16.msra.mxu0 %v1331
      %1346 = vmatmul.bf16.gmra.mxu0 %v1336
      %v1347 = vpop.f32.mrf.mxu0
      %v1348 = vadd.f32 0.0, %v1347
      %v1349 = vpop.f32.mrf.mxu0
      %v1350 = vadd.f32 0.0, %v1349
      %1351 = vdwg.mxu0
      %1352 = vmatpush.bf16.msra.mxu0 0
      %1353 = vmatpush.bf16.msra.mxu0 0
      %1354 = vmatpush.bf16.msra.mxu0 0
      %1355 = vmatpush.bf16.msra.mxu0 0
      %1356 = vmatpush.bf16.msra.mxu0 0
      %1357 = vmatpush.bf16.msra.mxu0 0
      %1358 = vmatpush.bf16.msra.mxu0 0
      %1359 = vmatpush.bf16.msra.mxu0 %v1332
      %1360 = vmatmul.bf16.gmra.mxu0 %v1336
      %v1361 = vpop.f32.mrf.mxu0
      %v1362 = vadd.f32 0.0, %v1361
      %v1363 = vpop.f32.mrf.mxu0
      %v1364 = vadd.f32 0.0, %v1363
      %1365 = vdwg.mxu0
      %v1366 = vadd.f32 %v1281, %v1348
      %v1367 = vadd.f32 %v1282, %v1362
      %v1368 = vadd.f32 %v1283, %v1350
      %v1369 = vadd.f32 %v1284, %v1364
      %s1370 = scalar_lea.vmem %s3, 32
      %v1371 = vld [vmem:[%s1370] sm:$0xf]
      %v1372 = vld [vmem:[%s1370 + $0x4] sm:$0xf]
      %v1375 = vunpack.c.l.b16 %v1371
      %v1376 = vunpack.c.l.b16 %v1372
      %v1377 = vpack.c.b16 %v1376, %v1375
      %1378 = vrot.lane.b32.xlu0 %v1068, 111
      %v1379 = vpop.permute.xlu0 %1378
      %1380 = vrot.lane.b32.xlu0 %v1065, 111
      %v1381 = vpop.permute.xlu0 %1380
      %1382 = vrot.lane.b32.xlu0 %v1071, 111
      %v1383 = vpop.permute.xlu0 %1382
      %v1384 = vsel %vm656, %v1379, %v1381
      %v1385 = vsel %vm656, %v1381, %v1383
      %v1389 = vsel %vm388, %v1377, 0
      %1391 = vmatpush.bf16.msra.mxu0 0
      %1392 = vmatpush.bf16.msra.mxu0 0
      %1393 = vmatpush.bf16.msra.mxu0 0
      %1394 = vmatpush.bf16.msra.mxu0 0
      %1395 = vmatpush.bf16.msra.mxu0 0
      %1396 = vmatpush.bf16.msra.mxu0 0
      %1397 = vmatpush.bf16.msra.mxu0 0
      %1398 = vmatpush.bf16.msra.mxu0 %v1384
      %1399 = vmatmul.bf16.gmra.mxu0 %v1389
      %v1400 = vpop.f32.mrf.mxu0
      %v1401 = vadd.f32 0.0, %v1400
      %v1402 = vpop.f32.mrf.mxu0
      %v1403 = vadd.f32 0.0, %v1402
      %1404 = vdwg.mxu0
      %1405 = vmatpush.bf16.msra.mxu0 0
      %1406 = vmatpush.bf16.msra.mxu0 0
      %1407 = vmatpush.bf16.msra.mxu0 0
      %1408 = vmatpush.bf16.msra.mxu0 0
      %1409 = vmatpush.bf16.msra.mxu0 0
      %1410 = vmatpush.bf16.msra.mxu0 0
      %1411 = vmatpush.bf16.msra.mxu0 0
      %1412 = vmatpush.bf16.msra.mxu0 %v1385
      %1413 = vmatmul.bf16.gmra.mxu0 %v1389
      %v1414 = vpop.f32.mrf.mxu0
      %v1415 = vadd.f32 0.0, %v1414
      %v1416 = vpop.f32.mrf.mxu0
      %v1417 = vadd.f32 0.0, %v1416
      %1418 = vdwg.mxu0
      %v1419 = vadd.f32 %v1366, %v1401
      %v1420 = vadd.f32 %v1367, %v1415
      %v1421 = vadd.f32 %v1368, %v1403
      %v1422 = vadd.f32 %v1369, %v1417
      %1423 = vrot.lane.b32.xlu0 %v1198, 18
      %v1424 = vpop.permute.xlu0 %1423
      %1425 = vrot.lane.b32.xlu0 %v1199, 18
      %v1426 = vpop.permute.xlu0 %1425
      %v1427 = vsel %vm700, %v1424, %v1426
      %v1428 = vunpack.c.l.b16 %v1424
      %v1429 = vunpack.c.h.b16 %v1424
      %v1430 = vunpack.c.l.b16 0
      %v1431 = vunpack.c.h.b16 0
      %vm1432 = vcmp.ne.s32.totalorder %v1428, %v1430
      %vm1433 = vcmp.ne.s32.totalorder %v1429, %v1431
      %vm1434 = vmpackc.low %vm1433, %vm1432
      %v1435 = vunpack.c.l.b16 %v1427
      %v1436 = vunpack.c.h.b16 %v1427
      %v1437 = vunpack.c.l.b16 0
      %v1438 = vunpack.c.h.b16 0
      %vm1439 = vcmp.ne.s32.totalorder %v1435, %v1437
      %vm1440 = vcmp.ne.s32.totalorder %v1436, %v1438
      %vm1441 = vmpackc.low %vm1440, %vm1439
      %v1442 = vunpack.c.l.b16 %v1426
      %v1443 = vunpack.c.h.b16 %v1426
      %v1444 = vunpack.c.l.b16 0
      %v1445 = vunpack.c.h.b16 0
      %vm1446 = vcmp.ne.s32.totalorder %v1442, %v1444
      %vm1447 = vcmp.ne.s32.totalorder %v1443, %v1445
      %vm1448 = vmpackc.low %vm1447, %vm1446
      %v1449 = vsel %vm1434, %v1068, 0
      %v1450 = vsel %vm1441, %v1065, 0
      %v1451 = vsel %vm1448, %v1071, 0
      %s1452 = scalar_lea.vmem %s3, 40
      %v1453 = vld [vmem:[%s1452] sm:$0xf]
      %v1454 = vld [vmem:[%s1452 + $0x4] sm:$0xf]
      %v1457 = vunpack.c.l.b16 %v1453
      %v1458 = vunpack.c.l.b16 %v1454
      %v1459 = vpack.c.b16 %v1458, %v1457
      %1463 = vrot.lane.b32.xlu0 %v1449, 110
      %v1464 = vpop.permute.xlu0 %1463
      %1465 = vrot.lane.b32.xlu0 %v1450, 110
      %v1466 = vpop.permute.xlu0 %1465
      %1467 = vrot.lane.b32.xlu0 %v1451, 110
      %v1468 = vpop.permute.xlu0 %1467
      %v1469 = vsel %vm743, %v1464, %v1466
      %v1470 = vsel %vm743, %v1466, %v1468
      %v1474 = vsel %vm388, %v1459, 0
      %1476 = vmatpush.bf16.msra.mxu0 0
      %1477 = vmatpush.bf16.msra.mxu0 0
      %1478 = vmatpush.bf16.msra.mxu0 0
      %1479 = vmatpush.bf16.msra.mxu0 0
      %1480 = vmatpush.bf16.msra.mxu0 0
      %1481 = vmatpush.bf16.msra.mxu0 0
      %1482 = vmatpush.bf16.msra.mxu0 0
      %1483 = vmatpush.bf16.msra.mxu0 %v1469
      %1484 = vmatmul.bf16.gmra.mxu0 %v1474
      %v1485 = vpop.f32.mrf.mxu0
      %v1486 = vadd.f32 0.0, %v1485
      %v1487 = vpop.f32.mrf.mxu0
      %v1488 = vadd.f32 0.0, %v1487
      %1489 = vdwg.mxu0
      %1490 = vmatpush.bf16.msra.mxu0 0
      %1491 = vmatpush.bf16.msra.mxu0 0
      %1492 = vmatpush.bf16.msra.mxu0 0
      %1493 = vmatpush.bf16.msra.mxu0 0
      %1494 = vmatpush.bf16.msra.mxu0 0
      %1495 = vmatpush.bf16.msra.mxu0 0
      %1496 = vmatpush.bf16.msra.mxu0 0
      %1497 = vmatpush.bf16.msra.mxu0 %v1470
      %1498 = vmatmul.bf16.gmra.mxu0 %v1474
      %v1499 = vpop.f32.mrf.mxu0
      %v1500 = vadd.f32 0.0, %v1499
      %v1501 = vpop.f32.mrf.mxu0
      %v1502 = vadd.f32 0.0, %v1501
      %1503 = vdwg.mxu0
      %v1504 = vadd.f32 %v1419, %v1486
      %v1505 = vadd.f32 %v1420, %v1500
      %v1506 = vadd.f32 %v1421, %v1488
      %v1507 = vadd.f32 %v1422, %v1502
      %1508 = vrot.lane.b32.xlu0 %v1082, 32
      %v1509 = vpop.permute.xlu0 %1508
      %1510 = vrot.lane.b32.xlu0 %v1083, 32
      %v1511 = vpop.permute.xlu0 %1510
      %v1512 = vsel %vm787, %v1509, %v1511
      %v1513 = vunpack.c.l.b16 %v1509
      %v1514 = vunpack.c.h.b16 %v1509
      %v1515 = vunpack.c.l.b16 0
      %v1516 = vunpack.c.h.b16 0
      %vm1517 = vcmp.ne.s32.totalorder %v1513, %v1515
      %vm1518 = vcmp.ne.s32.totalorder %v1514, %v1516
      %vm1519 = vmpackc.low %vm1518, %vm1517
      %v1520 = vunpack.c.l.b16 %v1512
      %v1521 = vunpack.c.h.b16 %v1512
      %v1522 = vunpack.c.l.b16 0
      %v1523 = vunpack.c.h.b16 0
      %vm1524 = vcmp.ne.s32.totalorder %v1520, %v1522
      %vm1525 = vcmp.ne.s32.totalorder %v1521, %v1523
      %vm1526 = vmpackc.low %vm1525, %vm1524
      %v1527 = vunpack.c.l.b16 %v1511
      %v1528 = vunpack.c.h.b16 %v1511
      %v1529 = vunpack.c.l.b16 0
      %v1530 = vunpack.c.h.b16 0
      %vm1531 = vcmp.ne.s32.totalorder %v1527, %v1529
      %vm1532 = vcmp.ne.s32.totalorder %v1528, %v1530
      %vm1533 = vmpackc.low %vm1532, %vm1531
      %v1534 = vsel %vm1519, %v1068, 0
      %v1535 = vsel %vm1526, %v1065, 0
      %v1536 = vsel %vm1533, %v1071, 0
      %s1537 = scalar_lea.vmem %s3, 48
      %v1538 = vld [vmem:[%s1537] sm:$0xf]
      %v1539 = vld [vmem:[%s1537 + $0x4] sm:$0xf]
      %v1542 = vunpack.c.l.b16 %v1538
      %v1543 = vunpack.c.l.b16 %v1539
      %v1544 = vpack.c.b16 %v1543, %v1542
      %1548 = vrot.lane.b32.xlu0 %v1534, 96
      %v1549 = vpop.permute.xlu0 %1548
      %1550 = vrot.lane.b32.xlu0 %v1535, 96
      %v1551 = vpop.permute.xlu0 %1550
      %1552 = vrot.lane.b32.xlu0 %v1536, 96
      %v1553 = vpop.permute.xlu0 %1552
      %v1554 = vsel %vm830, %v1549, %v1551
      %v1555 = vsel %vm830, %v1551, %v1553
      %v1559 = vsel %vm388, %v1544, 0
      %1561 = vmatpush.bf16.msra.mxu0 0
      %1562 = vmatpush.bf16.msra.mxu0 0
      %1563 = vmatpush.bf16.msra.mxu0 0
      %1564 = vmatpush.bf16.msra.mxu0 0
      %1565 = vmatpush.bf16.msra.mxu0 0
      %1566 = vmatpush.bf16.msra.mxu0 0
      %1567 = vmatpush.bf16.msra.mxu0 0
      %1568 = vmatpush.bf16.msra.mxu0 %v1554
      %1569 = vmatmul.bf16.gmra.mxu0 %v1559
      %v1570 = vpop.f32.mrf.mxu0
      %v1571 = vadd.f32 0.0, %v1570
      %v1572 = vpop.f32.mrf.mxu0
      %v1573 = vadd.f32 0.0, %v1572
      %1574 = vdwg.mxu0
      %1575 = vmatpush.bf16.msra.mxu0 0
      %1576 = vmatpush.bf16.msra.mxu0 0
      %1577 = vmatpush.bf16.msra.mxu0 0
      %1578 = vmatpush.bf16.msra.mxu0 0
      %1579 = vmatpush.bf16.msra.mxu0 0
      %1580 = vmatpush.bf16.msra.mxu0 0
      %1581 = vmatpush.bf16.msra.mxu0 0
      %1582 = vmatpush.bf16.msra.mxu0 %v1555
      %1583 = vmatmul.bf16.gmra.mxu0 %v1559
      %v1584 = vpop.f32.mrf.mxu0
      %v1585 = vadd.f32 0.0, %v1584
      %v1586 = vpop.f32.mrf.mxu0
      %v1587 = vadd.f32 0.0, %v1586
      %1588 = vdwg.mxu0
      %v1589 = vadd.f32 %v1504, %v1571
      %v1590 = vadd.f32 %v1505, %v1585
      %v1591 = vadd.f32 %v1506, %v1573
      %v1592 = vadd.f32 %v1507, %v1587
      %s1593 = scalar_lea.vmem %s3, 56
      %v1594 = vld [vmem:[%s1593] sm:$0xf]
      %v1595 = vld [vmem:[%s1593 + $0x4] sm:$0xf]
      %v1598 = vunpack.c.l.b16 %v1594
      %v1599 = vunpack.c.l.b16 %v1595
      %v1600 = vpack.c.b16 %v1599, %v1598
      %1601 = vrot.lane.b32.xlu0 %v1068, 95
      %v1602 = vpop.permute.xlu0 %1601
      %1603 = vrot.lane.b32.xlu0 %v1065, 95
      %v1604 = vpop.permute.xlu0 %1603
      %1605 = vrot.lane.b32.xlu0 %v1071, 95
      %v1606 = vpop.permute.xlu0 %1605
      %v1607 = vsel %vm884, %v1602, %v1604
      %v1608 = vsel %vm884, %v1604, %v1606
      %v1612 = vsel %vm388, %v1600, 0
      %1614 = vmatpush.bf16.msra.mxu0 0
      %1615 = vmatpush.bf16.msra.mxu0 0
      %1616 = vmatpush.bf16.msra.mxu0 0
      %1617 = vmatpush.bf16.msra.mxu0 0
      %1618 = vmatpush.bf16.msra.mxu0 0
      %1619 = vmatpush.bf16.msra.mxu0 0
      %1620 = vmatpush.bf16.msra.mxu0 0
      %1621 = vmatpush.bf16.msra.mxu0 %v1607
      %1622 = vmatmul.bf16.gmra.mxu0 %v1612
      %v1623 = vpop.f32.mrf.mxu0
      %v1624 = vadd.f32 0.0, %v1623
      %v1625 = vpop.f32.mrf.mxu0
      %v1626 = vadd.f32 0.0, %v1625
      %1627 = vdwg.mxu0
      %1628 = vmatpush.bf16.msra.mxu0 0
      %1629 = vmatpush.bf16.msra.mxu0 0
      %1630 = vmatpush.bf16.msra.mxu0 0
      %1631 = vmatpush.bf16.msra.mxu0 0
      %1632 = vmatpush.bf16.msra.mxu0 0
      %1633 = vmatpush.bf16.msra.mxu0 0
      %1634 = vmatpush.bf16.msra.mxu0 0
      %1635 = vmatpush.bf16.msra.mxu0 %v1608
      %1636 = vmatmul.bf16.gmra.mxu0 %v1612
      %v1637 = vpop.f32.mrf.mxu0
      %v1638 = vadd.f32 0.0, %v1637
      %v1639 = vpop.f32.mrf.mxu0
      %v1640 = vadd.f32 0.0, %v1639
      %1641 = vdwg.mxu0
      %v1642 = vadd.f32 %v1589, %v1624
      %v1643 = vadd.f32 %v1590, %v1638
      %v1644 = vadd.f32 %v1591, %v1626
      %v1645 = vadd.f32 %v1592, %v1640
      %1646 = vrot.lane.b32.xlu0 %v1198, 34
      %v1647 = vpop.permute.xlu0 %1646
      %1648 = vrot.lane.b32.xlu0 %v1199, 34
      %v1649 = vpop.permute.xlu0 %1648
      %v1650 = vsel %vm928, %v1647, %v1649
      %v1651 = vunpack.c.l.b16 %v1647
      %v1652 = vunpack.c.h.b16 %v1647
      %v1653 = vunpack.c.l.b16 0
      %v1654 = vunpack.c.h.b16 0
      %vm1655 = vcmp.ne.s32.totalorder %v1651, %v1653
      %vm1656 = vcmp.ne.s32.totalorder %v1652, %v1654
      %vm1657 = vmpackc.low %vm1656, %vm1655
      %v1658 = vunpack.c.l.b16 %v1650
      %v1659 = vunpack.c.h.b16 %v1650
      %v1660 = vunpack.c.l.b16 0
      %v1661 = vunpack.c.h.b16 0
      %vm1662 = vcmp.ne.s32.totalorder %v1658, %v1660
      %vm1663 = vcmp.ne.s32.totalorder %v1659, %v1661
      %vm1664 = vmpackc.low %vm1663, %vm1662
      %v1665 = vunpack.c.l.b16 %v1649
      %v1666 = vunpack.c.h.b16 %v1649
      %v1667 = vunpack.c.l.b16 0
      %v1668 = vunpack.c.h.b16 0
      %vm1669 = vcmp.ne.s32.totalorder %v1665, %v1667
      %vm1670 = vcmp.ne.s32.totalorder %v1666, %v1668
      %vm1671 = vmpackc.low %vm1670, %vm1669
      %v1672 = vsel %vm1657, %v1068, 0
      %v1673 = vsel %vm1664, %v1065, 0
      %v1674 = vsel %vm1671, %v1071, 0
      %s1675 = scalar_lea.vmem %s3, 64
      %v1676 = vld [vmem:[%s1675] sm:$0xf]
      %v1677 = vld [vmem:[%s1675 + $0x4] sm:$0xf]
      %v1680 = vunpack.c.l.b16 %v1676
      %v1681 = vunpack.c.l.b16 %v1677
      %v1682 = vpack.c.b16 %v1681, %v1680
      %1686 = vrot.lane.b32.xlu0 %v1672, 94
      %v1687 = vpop.permute.xlu0 %1686
      %1688 = vrot.lane.b32.xlu0 %v1673, 94
      %v1689 = vpop.permute.xlu0 %1688
      %1690 = vrot.lane.b32.xlu0 %v1674, 94
      %v1691 = vpop.permute.xlu0 %1690
      %v1692 = vsel %vm971, %v1687, %v1689
      %v1693 = vsel %vm971, %v1689, %v1691
      %v1697 = vsel %vm388, %v1682, 0
      %1699 = vmatpush.bf16.msra.mxu0 0
      %1700 = vmatpush.bf16.msra.mxu0 0
      %1701 = vmatpush.bf16.msra.mxu0 0
      %1702 = vmatpush.bf16.msra.mxu0 0
      %1703 = vmatpush.bf16.msra.mxu0 0
      %1704 = vmatpush.bf16.msra.mxu0 0
      %1705 = vmatpush.bf16.msra.mxu0 0
      %1706 = vmatpush.bf16.msra.mxu0 %v1692
      %1707 = vmatmul.bf16.gmra.mxu0 %v1697
      %v1708 = vpop.f32.mrf.mxu0
      %v1709 = vadd.f32 0.0, %v1708
      %v1710 = vpop.f32.mrf.mxu0
      %v1711 = vadd.f32 0.0, %v1710
      %1712 = vdwg.mxu0
      %1713 = vmatpush.bf16.msra.mxu0 0
      %1714 = vmatpush.bf16.msra.mxu0 0
      %1715 = vmatpush.bf16.msra.mxu0 0
      %1716 = vmatpush.bf16.msra.mxu0 0
      %1717 = vmatpush.bf16.msra.mxu0 0
      %1718 = vmatpush.bf16.msra.mxu0 0
      %1719 = vmatpush.bf16.msra.mxu0 0
      %1720 = vmatpush.bf16.msra.mxu0 %v1693
      %1721 = vmatmul.bf16.gmra.mxu0 %v1697
      %v1722 = vpop.f32.mrf.mxu0
      %v1723 = vadd.f32 0.0, %v1722
      %v1724 = vpop.f32.mrf.mxu0
      %v1725 = vadd.f32 0.0, %v1724
      %1726 = vdwg.mxu0
      %v1727 = vadd.f32 %v1642, %v1709
      %v1728 = vadd.f32 %v1643, %v1723
      %v1729 = vadd.f32 %v1644, %v1711
      %v1730 = vadd.f32 %v1645, %v1725
      %v1731 = vld [vmem:[%s6] sm:$0xff]
      %v1732 = vld [vmem:[%s6 + $0x8] sm:$0xff]
      %1734 = vset.pattern.permute.xlu0 0
      %1735 = vperm.xlu0 %1734, %v1731
      %v1736 = vpop.permute.xlu0 %1735
      %1739 = vset.pattern.permute.xlu0 0
      %1740 = vperm.xlu0 %1739, %v1732
      %v1741 = vpop.permute.xlu0 %1740
      %v1743 = vmul.f32 %v1727, %v1736
      %v1744 = vmul.f32 %v1728, %v1736
      %v1745 = vmul.f32 %v1729, %v1741
      %v1746 = vmul.f32 %v1730, %v1741
      %v1747 = vld [vmem:[%s7] sm:$0xff]
      %v1748 = vld [vmem:[%s7 + $0x8] sm:$0xff]
      %1750 = vset.pattern.permute.xlu0 0
      %1751 = vperm.xlu0 %1750, %v1747
      %v1752 = vpop.permute.xlu0 %1751
      %1755 = vset.pattern.permute.xlu0 0
      %1756 = vperm.xlu0 %1755, %v1748
      %v1757 = vpop.permute.xlu0 %1756
      %v1759 = vadd.f32 %v1743, %v1752
      %v1760 = vadd.f32 %v1744, %v1752
      %v1761 = vadd.f32 %v1745, %v1757
      %v1762 = vadd.f32 %v1746, %v1757
      %v1763 = vld [vmem:[%s300] sm:$0xff]
      %v1764 = vld [vmem:[%s300 + $0x8] sm:$0xff]
      %v1765 = vld [vmem:[%s300 + $0x10] sm:$0xff]
      %v1766 = vld [vmem:[%s300 + $0x18] sm:$0xff]
      %v1767 = vadd.f32 %v1759, %v1763
      %v1768 = vadd.f32 %v1760, %v1764
      %v1769 = vadd.f32 %v1761, %v1765
      %v1770 = vadd.f32 %v1762, %v1766
      %v1771 = vmax.f32 %v1767, 0.0
      %v1772 = vmax.f32 %v1768, 0.0
      %v1773 = vmax.f32 %v1769, 0.0
      %v1774 = vmax.f32 %v1770, 0.0
      %1775 = vst [vmem:[%s305] sm:$0xff] %v1771
      %1776 = vst [vmem:[%s305 + $0x8] sm:$0xff] %v1772
      %1777 = vst [vmem:[%s305 + $0x10] sm:$0xff] %v1773
      %1778 = vst [vmem:[%s305 + $0x18] sm:$0xff] %v1774
      %p1779 = scmp.lt.s32.totalorder %s19, 1
      %s1780 = scalar_select %p1779, %s19, 1
      %s1781 = smul.addr %s1780, 4
      %s1782 = smul.addr %s1781, 8
      %s1783 = scalar_lea.vmem %s8, %s1782
      // Predicated region
      $region53: #{basic_block_forward.1} parent=51 // pred_check
        %p1784 = pneg %p210
      $region54: #{basic_block_forward.1} parent=51 // pred_check_branch
        %1786 = sbr.rel (%p1784) target = $region56
      $region55: #{basic_block_forward.1} parent=51 // pred_region
        _
      $region56: #{basic_block_forward.1} parent=51 // pred_fallthru
        _
    $region52: #{basic_block_forward.1} parent=5 // pred_fallthru
      _
    %p1787 = scmp.le.s32.totalorder 2, %s14
    // Predicated region
    $region57: #{basic_block_forward.1} parent=5 // pred_check
      %p1788 = pneg %p1787
    $region58: #{basic_block_forward.1} parent=5 // pred_check_branch
      %1790 = sbr.rel (%p1788) target = $region60
    $region59: #{basic_block_forward.1} parent=5 // pred_region
      %s1791 = ssub.s32 %s14, 2
      // Predicated region
      $region61: #{basic_block_forward.1} parent=59 // pred_check
        %p1792 = pneg %p216
      $region62: #{basic_block_forward.1} parent=59 // pred_check_branch
        %1794 = sbr.rel (%p1792) target = $region64
      $region63: #{basic_block_forward.1} parent=59 // pred_region
        %p1795 = scmp.lt.s32.totalorder %s20, 1
        %s1796 = scalar_select %p1795, %s20, 1
        %s1797 = smul.addr %s1796, 4
        %s1798 = smul.addr %s1797, 8
        %s1799 = scalar_lea.vmem %s8, %s1798
      $region64: #{basic_block_forward.1} parent=59 // pred_fallthru
        _
    $region60: #{basic_block_forward.1} parent=5 // pred_fallthru
      _
  $region6: #{basic_block_forward.1} parent=0 // loop_footer
    %s18 = sadd.s32 1, %s14
  $region7: #{basic_block_forward.1} parent=0 // loop_footer_branch
    %13 = sbr.rel target = $region3
  $region8: #{basic_block_forward.1} parent=0 // loop_exit
    _

</llo_original>
